<compile_context>
chip_gen: v6e
topology: v6e:2x2x1
jax: 0.10.0
libtpu: 0.0.40
codegen_flags: <defaults>
</compile_context>

<pallas_src>
import math

import jax
import jax.numpy as jnp
from jax.experimental import pallas as pl
from jax.experimental.pallas import tpu as pltpu

# ---------------- configuration (small, consistent with the module) ----------
B = 2          # batch
S = 8          # sequence length
D_MODEL = 32   # d_model
N_HEAD = 2     # attention heads
D_K = D_MODEL // N_HEAD
D_FF = 32      # feed-forward hidden dim
VOCAB = 10     # vocab size
N_LAYERS = 6   # Encoder default N=6
PAD_IDX = 0
LN_EPS = 1e-5
BS = B * S     # flattened (batch * seq) rows


# ---------------------------- Pallas kernel ----------------------------------
def encoder_stack_kernel(x_in_ref, mask_ref,
                         wqkv_ref, wo_ref,
                         ln1g_ref, ln1b_ref,
                         w1_ref, b1_ref, w2_ref, b2_ref,
                         ln2g_ref, ln2b_ref,
                         o_ref, x_sc):
    """All N_LAYERS encoder layers; grid axis = layer, x resident in VMEM."""
    layer = pl.program_id(0)

    # Load embedded input into the resident activation scratch once.
    @pl.when(layer == 0)
    def _():
        x_sc[...] = x_in_ref[...]

    x = x_sc[...]                          # (BS, D)
    masked = mask_ref[...] > 0.5           # (BS, BS) True where key is masked

    def layernorm(y, g, b):
        mu = jnp.mean(y, axis=-1, keepdims=True)
        var = jnp.mean((y - mu) ** 2, axis=-1, keepdims=True)
        return (y - mu) * jax.lax.rsqrt(var + LN_EPS) * g + b

    # ---- multi-head self-attention ----
    # Fused QKV projection: one MXU push over the whole slab.
    qkv = jnp.dot(x, wqkv_ref[...], preferred_element_type=jnp.float32)  # (BS, 3D)
    wo = wo_ref[...]
    scale = 1.0 / math.sqrt(D_K)

    attn_out = jnp.zeros((BS, D_MODEL), jnp.float32)
    for h in range(N_HEAD):                # static unroll (N_HEAD = 2)
        qh = qkv[:, h * D_K:(h + 1) * D_K]
        kh = qkv[:, D_MODEL + h * D_K:D_MODEL + (h + 1) * D_K]
        vh = qkv[:, 2 * D_MODEL + h * D_K:2 * D_MODEL + (h + 1) * D_K]

        scores = jnp.dot(qh, kh.T, preferred_element_type=jnp.float32) * scale
        scores = jnp.where(masked, -1.0e9, scores)          # masked_fill(-1e9)
        scores = scores - jnp.max(scores, axis=-1, keepdims=True)
        p = jnp.exp(scores)
        p = p * pl.reciprocal(jnp.sum(p, axis=-1, keepdims=True), approx=True)

        ctx_h = jnp.dot(p, vh, preferred_element_type=jnp.float32)       # (BS, d_k)
        # sum-over-heads form of concat(ctx) @ W_o
        attn_out = attn_out + jnp.dot(ctx_h, wo[h * D_K:(h + 1) * D_K, :],
                                      preferred_element_type=jnp.float32)

    x1 = layernorm(attn_out + x, ln1g_ref[...], ln1b_ref[...])           # (BS, D)

    # ---- feed-forward net ----
    h1 = jnp.maximum(
        jnp.dot(x1, w1_ref[...], preferred_element_type=jnp.float32) + b1_ref[...],
        0.0)                                                             # (BS, D_FF)
    h2 = jnp.dot(h1, w2_ref[...], preferred_element_type=jnp.float32) + b2_ref[...]
    x2 = layernorm(h2 + x1, ln2g_ref[...], ln2b_ref[...])                # (BS, D)

    # Keep activation resident for the next layer.
    x_sc[...] = x2

    @pl.when(layer == N_LAYERS - 1)
    def _():
        o_ref[...] = x2


def encoder_stack(x_flat, mask2d, stacked):
    """x_flat: (B*S, D) f32, mask2d: (B*S, B*S) f32. Returns (B*S, D) f32."""
    (wqkv, wo, ln1g, ln1b, w1, b1, w2, b2, ln2g, ln2b) = stacked

    def full(arr):
        nd = arr.ndim
        return pl.BlockSpec(arr.shape, lambda l, _nd=nd: (0,) * _nd)

    def per_layer(arr):
        nd = arr.ndim
        # leading layer dim squeezed out; only 1 layer's block resident per step
        return pl.BlockSpec((None,) + arr.shape[1:],
                            lambda l, _nd=nd: (l,) + (0,) * (_nd - 1))

    in_specs = [
        full(x_flat),                      # embedded input (read at layer 0)
        full(mask2d),                      # attention mask
        per_layer(wqkv), per_layer(wo),
        per_layer(ln1g), per_layer(ln1b),
        per_layer(w1), per_layer(b1), per_layer(w2), per_layer(b2),
        per_layer(ln2g), per_layer(ln2b),
    ]
    out_spec = pl.BlockSpec((BS, D_MODEL), lambda l: (0, 0))

    return pl.pallas_call(
        encoder_stack_kernel,
        out_shape=jax.ShapeDtypeStruct((BS, D_MODEL), jnp.float32),
        grid=(N_LAYERS,),
        in_specs=in_specs,
        out_specs=out_spec,
        scratch_shapes=[pltpu.VMEM((BS, D_MODEL), jnp.float32)],
        compiler_params=pltpu.CompilerParams(
            dimension_semantics=("arbitrary",)),   # layers are sequential
    )(x_flat, mask2d, wqkv, wo, ln1g, ln1b, w1, b1, w2, b2, ln2g, ln2b)


# ------------------------------ glue (plain JAX) ------------------------------
def positional_encoding(seq_len, d_model):
    position = jnp.arange(seq_len, dtype=jnp.float32)[:, None]           # (S, 1)
    div_term = jnp.exp(jnp.arange(0, d_model, 2, dtype=jnp.float32)
                       * (-math.log(10000.0) / d_model))                  # (D/2,)
    pe = jnp.zeros((seq_len, d_model), dtype=jnp.float32)
    pe = pe.at[:, 0::2].set(jnp.sin(position * div_term))
    pe = pe.at[:, 1::2].set(jnp.cos(position * div_term))
    return pe                                                             # (S, D)


def init_params(key):
    """Deterministic synthetic parameters, stacked along a leading layer axis."""
    keys = jax.random.split(key, 1 + N_LAYERS)
    emb_table = jax.random.normal(keys[0], (VOCAB, D_MODEL), jnp.float32) * 0.02

    wqkv, wo, ln1g, ln1b, w1, b1, w2, b2, ln2g, ln2b = ([] for _ in range(10))
    for i in range(N_LAYERS):
        ks = jax.random.split(keys[1 + i], 6)
        n = lambda k, shp: jax.random.normal(k, shp, jnp.float32) * 0.02
        wq_i = n(ks[0], (D_MODEL, D_MODEL))
        wk_i = n(ks[1], (D_MODEL, D_MODEL))
        wv_i = n(ks[2], (D_MODEL, D_MODEL))
        wqkv.append(jnp.concatenate([wq_i, wk_i, wv_i], axis=1))  # (D, 3D)
        wo.append(n(ks[3], (D_MODEL, D_MODEL)))
        ln1g.append(jnp.ones((1, D_MODEL), jnp.float32))
        ln1b.append(jnp.zeros((1, D_MODEL), jnp.float32))
        w1.append(n(ks[4], (D_MODEL, D_FF)))
        b1.append(jnp.zeros((1, D_FF), jnp.float32))
        w2.append(n(ks[5], (D_FF, D_MODEL)))
        b2.append(jnp.zeros((1, D_MODEL), jnp.float32))
        ln2g.append(jnp.ones((1, D_MODEL), jnp.float32))
        ln2b.append(jnp.zeros((1, D_MODEL), jnp.float32))

    stacked = tuple(jnp.stack(t, axis=0)
                    for t in (wqkv, wo, ln1g, ln1b, w1, b1, w2, b2, ln2g, ln2b))
    return emb_table, stacked


@jax.jit
def encoder_forward(tokens, emb_table,
                    wqkv, wo, ln1g, ln1b, w1, b1, w2, b2, ln2g, ln2b):
    # padding mask: key positions where token == PAD; plus block-diagonal mask so
    # the flattened (B*S) slab cannot attend across batch elements.
    pad = (tokens == PAD_IDX)                                   # (B, S) bool
    batch_ids = jnp.arange(BS, dtype=jnp.int32) // S            # (BS,)
    cross = batch_ids[:, None] != batch_ids[None, :]            # (BS, BS)
    mask2d = (cross | pad.reshape(BS)[None, :]).astype(jnp.float32)

    # Embeddings: lut(x) * sqrt(d_model), then positional encoding.
    x = jnp.take(emb_table, tokens, axis=0) * math.sqrt(D_MODEL)  # (B, S, D)
    x = x + positional_encoding(S, D_MODEL)[None]
    x_flat = x.reshape(BS, D_MODEL)

    y = encoder_stack(x_flat, mask2d,
                      (wqkv, wo, ln1g, ln1b, w1, b1, w2, b2, ln2g, ln2b))
    return y.reshape(B, S, D_MODEL)


# ----------------------------------- main -------------------------------------
if __name__ == "__main__":
    key = jax.random.PRNGKey(0)
    emb_table, stacked = init_params(key)

    # deterministic token ids with trailing padding (PAD_IDX = 0)
    tokens = jnp.array(
        [[1, 2, 3, 4, 5, 6, 0, 0],
         [4, 5, 1, 2, 0, 0, 0, 0]], dtype=jnp.int32)             # (B, S)

    memory = encoder_forward(tokens, emb_table, *stacked)
    jax.block_until_ready(memory)

    assert memory.shape == (B, S, D_MODEL)
    assert jnp.all(jnp.isfinite(memory))
    print("KERNEL_OK")
</pallas_src>

<mosaic_0001>
module attributes {stable_mosaic.version = 11 : i64} {
  func.func @encoder_stack_kernel(%arg0: i32, %arg1: memref<16x32xf32, #tpu.memory_space<vmem>>, %arg2: memref<16x16xf32, #tpu.memory_space<vmem>>, %arg3: memref<1x32x96xf32, #tpu.memory_space<vmem>>, %arg4: memref<1x32x32xf32, #tpu.memory_space<vmem>>, %arg5: memref<1x1x32xf32, #tpu.memory_space<vmem>>, %arg6: memref<1x1x32xf32, #tpu.memory_space<vmem>>, %arg7: memref<1x32x32xf32, #tpu.memory_space<vmem>>, %arg8: memref<1x1x32xf32, #tpu.memory_space<vmem>>, %arg9: memref<1x32x32xf32, #tpu.memory_space<vmem>>, %arg10: memref<1x1x32xf32, #tpu.memory_space<vmem>>, %arg11: memref<1x1x32xf32, #tpu.memory_space<vmem>>, %arg12: memref<1x1x32xf32, #tpu.memory_space<vmem>>, %arg13: memref<16x32xf32, #tpu.memory_space<vmem>>, %arg14: memref<16x32xf32, #tpu.memory_space<vmem>>) attributes {dimension_semantics = [#tpu.dimension_semantics<arbitrary>], iteration_bounds = array<i64: 6>, scalar_prefetch = 0 : i64, scratch_operands = 1 : i64, tpu.core_type = #tpu.core_type<tc>, window_params = [{pipeline_mode = #tpu.pipeline_mode<synchronous>, transform_indices = @transform_0, window_bounds = array<i64: 16, 32>}, {pipeline_mode = #tpu.pipeline_mode<synchronous>, transform_indices = @transform_1, window_bounds = array<i64: 16, 16>}, {transform_indices = @transform_2, window_bounds = array<i64: 1, 32, 96>}, {transform_indices = @transform_3, window_bounds = array<i64: 1, 32, 32>}, {transform_indices = @transform_4, window_bounds = array<i64: 1, 1, 32>}, {transform_indices = @transform_5, window_bounds = array<i64: 1, 1, 32>}, {transform_indices = @transform_6, window_bounds = array<i64: 1, 32, 32>}, {transform_indices = @transform_7, window_bounds = array<i64: 1, 1, 32>}, {transform_indices = @transform_8, window_bounds = array<i64: 1, 32, 32>}, {transform_indices = @transform_9, window_bounds = array<i64: 1, 1, 32>}, {transform_indices = @transform_10, window_bounds = array<i64: 1, 1, 32>}, {transform_indices = @transform_11, window_bounds = array<i64: 1, 1, 32>}, {pipeline_mode = #tpu.pipeline_mode<synchronous>, transform_indices = @transform_12, window_bounds = array<i64: 16, 32>}]} {
    %c0_i32 = arith.constant 0 : i32
    %0 = arith.cmpi eq, %arg0, %c0_i32 : i32
    %1 = arith.extui %0 : i1 to i32
    %c0_i32_0 = arith.constant 0 : i32
    %2 = arith.cmpi ne, %1, %c0_i32_0 : i32
    scf.if %2 {
      %c0_66 = arith.constant 0 : index
      %c0_67 = arith.constant 0 : index
      %133 = vector.load %arg1[%c0_66, %c0_67] : memref<16x32xf32, #tpu.memory_space<vmem>>, vector<16x32xf32>
      %c0_68 = arith.constant 0 : index
      %c0_69 = arith.constant 0 : index
      %134 = vector.load %arg14[%c0_68, %c0_69] : memref<16x32xf32, #tpu.memory_space<vmem>>, vector<16x32xf32>
      tpu.vector_store %arg14[%c0_68, %c0_69], %133 {strides = array<i32>} : memref<16x32xf32, #tpu.memory_space<vmem>>, vector<16x32xf32>,
    } else {
    }
    %c0 = arith.constant 0 : index
    %c0_1 = arith.constant 0 : index
    %3 = vector.load %arg14[%c0, %c0_1] : memref<16x32xf32, #tpu.memory_space<vmem>>, vector<16x32xf32>
    %c0_2 = arith.constant 0 : index
    %c0_3 = arith.constant 0 : index
    %4 = vector.load %arg2[%c0_2, %c0_3] : memref<16x16xf32, #tpu.memory_space<vmem>>, vector<16x16xf32>
    %cst = arith.constant 5.000000e-01 : f32
    %5 = vector.broadcast %cst : f32 to vector<16x16xf32>
    %6 = arith.cmpf ogt, %4, %5 : vector<16x16xf32>
    %c0_4 = arith.constant 0 : index
    %c0_5 = arith.constant 0 : index
    %c0_6 = arith.constant 0 : index
    %7 = vector.load %arg3[%c0_4, %c0_5, %c0_6] : memref<1x32x96xf32, #tpu.memory_space<vmem>>, vector<1x32x96xf32>
    %8 = vector.shape_cast %7 : vector<1x32x96xf32> to vector<32x96xf32>
    %cst_7 = arith.constant dense<0.000000e+00> : vector<16x96xf32>
    %9 = tpu.matmul %3, %8, %cst_7 {dimension_numbers = #tpu.dot_dimension_numbers<[1], [0], [0], [1], [0, 0, 1, 1], [], []>} : vector<16x32xf32>, vector<32x96xf32>, vector<16x96xf32> -> vector<16x96xf32>
    %c0_8 = arith.constant 0 : index
    %c0_9 = arith.constant 0 : index
    %c0_10 = arith.constant 0 : index
    %10 = vector.load %arg4[%c0_8, %c0_9, %c0_10] : memref<1x32x32xf32, #tpu.memory_space<vmem>>, vector<1x32x32xf32>
    %11 = vector.shape_cast %10 : vector<1x32x32xf32> to vector<32x32xf32>
    %cst_11 = arith.constant 0.000000e+00 : f32
    %12 = vector.broadcast %cst_11 : f32 to vector<16x32xf32>
    %13 = vector.extract_strided_slice %9 {offsets = [0, 0], sizes = [16, 16], strides = [1, 1]} : vector<16x96xf32> to vector<16x16xf32>
    %14 = vector.extract_strided_slice %9 {offsets = [0, 32], sizes = [16, 16], strides = [1, 1]} : vector<16x96xf32> to vector<16x16xf32>
    %15 = vector.extract_strided_slice %9 {offsets = [0, 64], sizes = [16, 16], strides = [1, 1]} : vector<16x96xf32> to vector<16x16xf32>
    %16 = tpu.transpose %14, [1, 0] : vector<16x16xf32> -> vector<16x16xf32>
    %cst_12 = arith.constant dense<0.000000e+00> : vector<16x16xf32>
    %17 = tpu.matmul %13, %16, %cst_12 {dimension_numbers = #tpu.dot_dimension_numbers<[1], [0], [0], [1], [0, 0, 1, 1], [], []>} : vector<16x16xf32>, vector<16x16xf32>, vector<16x16xf32> -> vector<16x16xf32>
    %cst_13 = arith.constant 2.500000e-01 : f32
    %18 = vector.broadcast %cst_13 : f32 to vector<16x16xf32>
    %19 = arith.mulf %17, %18 : vector<16x16xf32>
    %cst_14 = arith.constant -1.000000e+09 : f32
    %20 = vector.broadcast %cst_14 : f32 to vector<16x16xf32>
    %21 = arith.select %6, %20, %19 : vector<16x16xi1>, vector<16x16xf32>
    %cst_15 = arith.constant dense<0xFF800000> : vector<16xf32>
    %22 = vector.multi_reduction <maximumf>, %21, %cst_15 [1] : vector<16x16xf32> to vector<16xf32>
    %23 = vector.shape_cast %22 : vector<16xf32> to vector<16x1xf32>
    %24 = vector.broadcast %23 : vector<16x1xf32> to vector<16x16xf32>
    %25 = arith.subf %21, %24 : vector<16x16xf32>
    %26 = math.exp %25 : vector<16x16xf32>
    %cst_16 = arith.constant dense<0.000000e+00> : vector<16xf32>
    %27 = vector.multi_reduction <add>, %26, %cst_16 [1] : vector<16x16xf32> to vector<16xf32>
    %28 = vector.shape_cast %27 : vector<16xf32> to vector<16x1xf32>
    %29 = tpu.reciprocal %28 {approx = true} : vector<16x1xf32> -> vector<16x1xf32>
    %30 = vector.broadcast %29 : vector<16x1xf32> to vector<16x16xf32>
    %31 = arith.mulf %26, %30 : vector<16x16xf32>
    %cst_17 = arith.constant dense<0.000000e+00> : vector<16x16xf32>
    %32 = tpu.matmul %31, %15, %cst_17 {dimension_numbers = #tpu.dot_dimension_numbers<[1], [0], [0], [1], [0, 0, 1, 1], [], []>} : vector<16x16xf32>, vector<16x16xf32>, vector<16x16xf32> -> vector<16x16xf32>
    %33 = vector.extract_strided_slice %11 {offsets = [0, 0], sizes = [16, 32], strides = [1, 1]} : vector<32x32xf32> to vector<16x32xf32>
    %cst_18 = arith.constant dense<0.000000e+00> : vector<16x32xf32>
    %34 = tpu.matmul %32, %33, %cst_18 {dimension_numbers = #tpu.dot_dimension_numbers<[1], [0], [0], [1], [0, 0, 1, 1], [], []>} : vector<16x16xf32>, vector<16x32xf32>, vector<16x32xf32> -> vector<16x32xf32>
    %35 = arith.addf %12, %34 : vector<16x32xf32>
    %36 = vector.extract_strided_slice %9 {offsets = [0, 16], sizes = [16, 16], strides = [1, 1]} : vector<16x96xf32> to vector<16x16xf32>
    %37 = vector.extract_strided_slice %9 {offsets = [0, 48], sizes = [16, 16], strides = [1, 1]} : vector<16x96xf32> to vector<16x16xf32>
    %38 = vector.extract_strided_slice %9 {offsets = [0, 80], sizes = [16, 16], strides = [1, 1]} : vector<16x96xf32> to vector<16x16xf32>
    %39 = tpu.transpose %37, [1, 0] : vector<16x16xf32> -> vector<16x16xf32>
    %cst_19 = arith.constant dense<0.000000e+00> : vector<16x16xf32>
    %40 = tpu.matmul %36, %39, %cst_19 {dimension_numbers = #tpu.dot_dimension_numbers<[1], [0], [0], [1], [0, 0, 1, 1], [], []>} : vector<16x16xf32>, vector<16x16xf32>, vector<16x16xf32> -> vector<16x16xf32>
    %cst_20 = arith.constant 2.500000e-01 : f32
    %41 = vector.broadcast %cst_20 : f32 to vector<16x16xf32>
    %42 = arith.mulf %40, %41 : vector<16x16xf32>
    %cst_21 = arith.constant -1.000000e+09 : f32
    %43 = vector.broadcast %cst_21 : f32 to vector<16x16xf32>
    %44 = arith.select %6, %43, %42 : vector<16x16xi1>, vector<16x16xf32>
    %cst_22 = arith.constant dense<0xFF800000> : vector<16xf32>
    %45 = vector.multi_reduction <maximumf>, %44, %cst_22 [1] : vector<16x16xf32> to vector<16xf32>
    %46 = vector.shape_cast %45 : vector<16xf32> to vector<16x1xf32>
    %47 = vector.broadcast %46 : vector<16x1xf32> to vector<16x16xf32>
    %48 = arith.subf %44, %47 : vector<16x16xf32>
    %49 = math.exp %48 : vector<16x16xf32>
    %cst_23 = arith.constant dense<0.000000e+00> : vector<16xf32>
    %50 = vector.multi_reduction <add>, %49, %cst_23 [1] : vector<16x16xf32> to vector<16xf32>
    %51 = vector.shape_cast %50 : vector<16xf32> to vector<16x1xf32>
    %52 = tpu.reciprocal %51 {approx = true} : vector<16x1xf32> -> vector<16x1xf32>
    %53 = vector.broadcast %52 : vector<16x1xf32> to vector<16x16xf32>
    %54 = arith.mulf %49, %53 : vector<16x16xf32>
    %cst_24 = arith.constant dense<0.000000e+00> : vector<16x16xf32>
    %55 = tpu.matmul %54, %38, %cst_24 {dimension_numbers = #tpu.dot_dimension_numbers<[1], [0], [0], [1], [0, 0, 1, 1], [], []>} : vector<16x16xf32>, vector<16x16xf32>, vector<16x16xf32> -> vector<16x16xf32>
    %56 = vector.extract_strided_slice %11 {offsets = [16, 0], sizes = [16, 32], strides = [1, 1]} : vector<32x32xf32> to vector<16x32xf32>
    %cst_25 = arith.constant dense<0.000000e+00> : vector<16x32xf32>
    %57 = tpu.matmul %55, %56, %cst_25 {dimension_numbers = #tpu.dot_dimension_numbers<[1], [0], [0], [1], [0, 0, 1, 1], [], []>} : vector<16x16xf32>, vector<16x32xf32>, vector<16x32xf32> -> vector<16x32xf32>
    %58 = arith.addf %35, %57 : vector<16x32xf32>
    %59 = arith.addf %58, %3 : vector<16x32xf32>
    %c0_26 = arith.constant 0 : index
    %c0_27 = arith.constant 0 : index
    %c0_28 = arith.constant 0 : index
    %60 = vector.load %arg5[%c0_26, %c0_27, %c0_28] : memref<1x1x32xf32, #tpu.memory_space<vmem>>, vector<1x1x32xf32>
    %61 = vector.shape_cast %60 : vector<1x1x32xf32> to vector<1x32xf32>
    %c0_29 = arith.constant 0 : index
    %c0_30 = arith.constant 0 : index
    %c0_31 = arith.constant 0 : index
    %62 = vector.load %arg6[%c0_29, %c0_30, %c0_31] : memref<1x1x32xf32, #tpu.memory_space<vmem>>, vector<1x1x32xf32>
    %63 = vector.shape_cast %62 : vector<1x1x32xf32> to vector<1x32xf32>
    %cst_32 = arith.constant dense<0.000000e+00> : vector<16xf32>
    %64 = vector.multi_reduction <add>, %59, %cst_32 [1] : vector<16x32xf32> to vector<16xf32>
    %65 = vector.shape_cast %64 : vector<16xf32> to vector<16x1xf32>
    %cst_33 = arith.constant 3.200000e+01 : f32
    %66 = vector.broadcast %cst_33 : f32 to vector<16x1xf32>
    %67 = arith.divf %65, %66 : vector<16x1xf32>
    %68 = vector.broadcast %67 : vector<16x1xf32> to vector<16x32xf32>
    %69 = arith.subf %59, %68 : vector<16x32xf32>
    %70 = arith.mulf %69, %69 : vector<16x32xf32>
    %cst_34 = arith.constant dense<0.000000e+00> : vector<16xf32>
    %71 = vector.multi_reduction <add>, %70, %cst_34 [1] : vector<16x32xf32> to vector<16xf32>
    %72 = vector.shape_cast %71 : vector<16xf32> to vector<16x1xf32>
    %cst_35 = arith.constant 3.200000e+01 : f32
    %73 = vector.broadcast %cst_35 : f32 to vector<16x1xf32>
    %74 = arith.divf %72, %73 : vector<16x1xf32>
    %75 = vector.broadcast %67 : vector<16x1xf32> to vector<16x32xf32>
    %76 = arith.subf %59, %75 : vector<16x32xf32>
    %cst_36 = arith.constant 9.99999974E-6 : f32
    %77 = vector.broadcast %cst_36 : f32 to vector<16x1xf32>
    %78 = arith.addf %74, %77 : vector<16x1xf32>
    %79 = math.rsqrt %78 : vector<16x1xf32>
    %80 = vector.broadcast %79 : vector<16x1xf32> to vector<16x32xf32>
    %81 = arith.mulf %76, %80 : vector<16x32xf32>
    %82 = vector.broadcast %61 : vector<1x32xf32> to vector<16x32xf32>
    %83 = arith.mulf %81, %82 : vector<16x32xf32>
    %84 = vector.broadcast %63 : vector<1x32xf32> to vector<16x32xf32>
    %85 = arith.addf %83, %84 : vector<16x32xf32>
    %c0_37 = arith.constant 0 : index
    %c0_38 = arith.constant 0 : index
    %c0_39 = arith.constant 0 : index
    %86 = vector.load %arg7[%c0_37, %c0_38, %c0_39] : memref<1x32x32xf32, #tpu.memory_space<vmem>>, vector<1x32x32xf32>
    %87 = vector.shape_cast %86 : vector<1x32x32xf32> to vector<32x32xf32>
    %cst_40 = arith.constant dense<0.000000e+00> : vector<16x32xf32>
    %88 = tpu.matmul %85, %87, %cst_40 {dimension_numbers = #tpu.dot_dimension_numbers<[1], [0], [0], [1], [0, 0, 1, 1], [], []>} : vector<16x32xf32>, vector<32x32xf32>, vector<16x32xf32> -> vector<16x32xf32>
    %c0_41 = arith.constant 0 : index
    %c0_42 = arith.constant 0 : index
    %c0_43 = arith.constant 0 : index
    %89 = vector.load %arg8[%c0_41, %c0_42, %c0_43] : memref<1x1x32xf32, #tpu.memory_space<vmem>>, vector<1x1x32xf32>
    %90 = vector.shape_cast %89 : vector<1x1x32xf32> to vector<1x32xf32>
    %91 = vector.broadcast %90 : vector<1x32xf32> to vector<16x32xf32>
    %92 = arith.addf %88, %91 : vector<16x32xf32>
    %cst_44 = arith.constant 0.000000e+00 : f32
    %93 = vector.broadcast %cst_44 : f32 to vector<16x32xf32>
    %94 = arith.maximumf %92, %93 : vector<16x32xf32>
    %c0_45 = arith.constant 0 : index
    %c0_46 = arith.constant 0 : index
    %c0_47 = arith.constant 0 : index
    %95 = vector.load %arg9[%c0_45, %c0_46, %c0_47] : memref<1x32x32xf32, #tpu.memory_space<vmem>>, vector<1x32x32xf32>
    %96 = vector.shape_cast %95 : vector<1x32x32xf32> to vector<32x32xf32>
    %cst_48 = arith.constant dense<0.000000e+00> : vector<16x32xf32>
    %97 = tpu.matmul %94, %96, %cst_48 {dimension_numbers = #tpu.dot_dimension_numbers<[1], [0], [0], [1], [0, 0, 1, 1], [], []>} : vector<16x32xf32>, vector<32x32xf32>, vector<16x32xf32> -> vector<16x32xf32>
    %c0_49 = arith.constant 0 : index
    %c0_50 = arith.constant 0 : index
    %c0_51 = arith.constant 0 : index
    %98 = vector.load %arg10[%c0_49, %c0_50, %c0_51] : memref<1x1x32xf32, #tpu.memory_space<vmem>>, vector<1x1x32xf32>
    %99 = vector.shape_cast %98 : vector<1x1x32xf32> to vector<1x32xf32>
    %100 = vector.broadcast %99 : vector<1x32xf32> to vector<16x32xf32>
    %101 = arith.addf %97, %100 : vector<16x32xf32>
    %102 = arith.addf %101, %85 : vector<16x32xf32>
    %c0_52 = arith.constant 0 : index
    %c0_53 = arith.constant 0 : index
    %c0_54 = arith.constant 0 : index
    %103 = vector.load %arg11[%c0_52, %c0_53, %c0_54] : memref<1x1x32xf32, #tpu.memory_space<vmem>>, vector<1x1x32xf32>
    %104 = vector.shape_cast %103 : vector<1x1x32xf32> to vector<1x32xf32>
    %c0_55 = arith.constant 0 : index
    %c0_56 = arith.constant 0 : index
    %c0_57 = arith.constant 0 : index
    %105 = vector.load %arg12[%c0_55, %c0_56, %c0_57] : memref<1x1x32xf32, #tpu.memory_space<vmem>>, vector<1x1x32xf32>
    %106 = vector.shape_cast %105 : vector<1x1x32xf32> to vector<1x32xf32>
    %cst_58 = arith.constant dense<0.000000e+00> : vector<16xf32>
    %107 = vector.multi_reduction <add>, %102, %cst_58 [1] : vector<16x32xf32> to vector<16xf32>
    %108 = vector.shape_cast %107 : vector<16xf32> to vector<16x1xf32>
    %cst_59 = arith.constant 3.200000e+01 : f32
    %109 = vector.broadcast %cst_59 : f32 to vector<16x1xf32>
    %110 = arith.divf %108, %109 : vector<16x1xf32>
    %111 = vector.broadcast %110 : vector<16x1xf32> to vector<16x32xf32>
    %112 = arith.subf %102, %111 : vector<16x32xf32>
    %113 = arith.mulf %112, %112 : vector<16x32xf32>
    %cst_60 = arith.constant dense<0.000000e+00> : vector<16xf32>
    %114 = vector.multi_reduction <add>, %113, %cst_60 [1] : vector<16x32xf32> to vector<16xf32>
    %115 = vector.shape_cast %114 : vector<16xf32> to vector<16x1xf32>
    %cst_61 = arith.constant 3.200000e+01 : f32
    %116 = vector.broadcast %cst_61 : f32 to vector<16x1xf32>
    %117 = arith.divf %115, %116 : vector<16x1xf32>
    %118 = vector.broadcast %110 : vector<16x1xf32> to vector<16x32xf32>
    %119 = arith.subf %102, %118 : vector<16x32xf32>
    %cst_62 = arith.constant 9.99999974E-6 : f32
    %120 = vector.broadcast %cst_62 : f32 to vector<16x1xf32>
    %121 = arith.addf %117, %120 : vector<16x1xf32>
    %122 = math.rsqrt %121 : vector<16x1xf32>
    %123 = vector.broadcast %122 : vector<16x1xf32> to vector<16x32xf32>
    %124 = arith.mulf %119, %123 : vector<16x32xf32>
    %125 = vector.broadcast %104 : vector<1x32xf32> to vector<16x32xf32>
    %126 = arith.mulf %124, %125 : vector<16x32xf32>
    %127 = vector.broadcast %106 : vector<1x32xf32> to vector<16x32xf32>
    %128 = arith.addf %126, %127 : vector<16x32xf32>
    %c0_63 = arith.constant 0 : index
    %c0_64 = arith.constant 0 : index
    %129 = vector.load %arg14[%c0_63, %c0_64] : memref<16x32xf32, #tpu.memory_space<vmem>>, vector<16x32xf32>
    tpu.vector_store %arg14[%c0_63, %c0_64], %128 {strides = array<i32>} : memref<16x32xf32, #tpu.memory_space<vmem>>, vector<16x32xf32>,
    %c5_i32 = arith.constant 5 : i32
    %130 = arith.cmpi eq, %arg0, %c5_i32 : i32
    %131 = arith.extui %130 : i1 to i32
    %c0_i32_65 = arith.constant 0 : i32
    %132 = arith.cmpi ne, %131, %c0_i32_65 : i32
    scf.if %132 {
      %c0_66 = arith.constant 0 : index
      %c0_67 = arith.constant 0 : index
      %133 = vector.load %arg13[%c0_66, %c0_67] : memref<16x32xf32, #tpu.memory_space<vmem>>, vector<16x32xf32>
      tpu.vector_store %arg13[%c0_66, %c0_67], %128 {strides = array<i32>} : memref<16x32xf32, #tpu.memory_space<vmem>>, vector<16x32xf32>,
    } else {
    }
    return
  }
  func.func @transform_0(%arg0: i32) -> (i32, i32) {
    %c0_i32 = arith.constant 0 : i32
    %c0_i32_0 = arith.constant 0 : i32
    %c0_i32_1 = arith.constant 0 : i32
    return %c0_i32, %c0_i32_0 : i32, i32
  }
  func.func @transform_1(%arg0: i32) -> (i32, i32) {
    %c0_i32 = arith.constant 0 : i32
    %c0_i32_0 = arith.constant 0 : i32
    %c0_i32_1 = arith.constant 0 : i32
    return %c0_i32, %c0_i32_0 : i32, i32
  }
  func.func @transform_2(%arg0: i32) -> (i32, i32, i32) {
    %c0_i32 = arith.constant 0 : i32
    %c0_i32_0 = arith.constant 0 : i32
    %c0_i32_1 = arith.constant 0 : i32
    return %arg0, %c0_i32, %c0_i32_0 : i32, i32, i32
  }
  func.func @transform_3(%arg0: i32) -> (i32, i32, i32) {
    %c0_i32 = arith.constant 0 : i32
    %c0_i32_0 = arith.constant 0 : i32
    %c0_i32_1 = arith.constant 0 : i32
    return %arg0, %c0_i32, %c0_i32_0 : i32, i32, i32
  }
  func.func @transform_4(%arg0: i32) -> (i32, i32, i32) {
    %c0_i32 = arith.constant 0 : i32
    %c0_i32_0 = arith.constant 0 : i32
    %c0_i32_1 = arith.constant 0 : i32
    return %arg0, %c0_i32, %c0_i32_0 : i32, i32, i32
  }
  func.func @transform_5(%arg0: i32) -> (i32, i32, i32) {
    %c0_i32 = arith.constant 0 : i32
    %c0_i32_0 = arith.constant 0 : i32
    %c0_i32_1 = arith.constant 0 : i32
    return %arg0, %c0_i32, %c0_i32_0 : i32, i32, i32
  }
  func.func @transform_6(%arg0: i32) -> (i32, i32, i32) {
    %c0_i32 = arith.constant 0 : i32
    %c0_i32_0 = arith.constant 0 : i32
    %c0_i32_1 = arith.constant 0 : i32
    return %arg0, %c0_i32, %c0_i32_0 : i32, i32, i32
  }
  func.func @transform_7(%arg0: i32) -> (i32, i32, i32) {
    %c0_i32 = arith.constant 0 : i32
    %c0_i32_0 = arith.constant 0 : i32
    %c0_i32_1 = arith.constant 0 : i32
    return %arg0, %c0_i32, %c0_i32_0 : i32, i32, i32
  }
  func.func @transform_8(%arg0: i32) -> (i32, i32, i32) {
    %c0_i32 = arith.constant 0 : i32
    %c0_i32_0 = arith.constant 0 : i32
    %c0_i32_1 = arith.constant 0 : i32
    return %arg0, %c0_i32, %c0_i32_0 : i32, i32, i32
  }
  func.func @transform_9(%arg0: i32) -> (i32, i32, i32) {
    %c0_i32 = arith.constant 0 : i32
    %c0_i32_0 = arith.constant 0 : i32
    %c0_i32_1 = arith.constant 0 : i32
    return %arg0, %c0_i32, %c0_i32_0 : i32, i32, i32
  }
  func.func @transform_10(%arg0: i32) -> (i32, i32, i32) {
    %c0_i32 = arith.constant 0 : i32
    %c0_i32_0 = arith.constant 0 : i32
    %c0_i32_1 = arith.constant 0 : i32
    return %arg0, %c0_i32, %c0_i32_0 : i32, i32, i32
  }
  func.func @transform_11(%arg0: i32) -> (i32, i32, i32) {
    %c0_i32 = arith.constant 0 : i32
    %c0_i32_0 = arith.constant 0 : i32
    %c0_i32_1 = arith.constant 0 : i32
    return %arg0, %c0_i32, %c0_i32_0 : i32, i32, i32
  }
  func.func @transform_12(%arg0: i32) -> (i32, i32) {
    %c0_i32 = arith.constant 0 : i32
    %c0_i32_0 = arith.constant 0 : i32
    %c0_i32_1 = arith.constant 0 : i32
    return %c0_i32, %c0_i32_0 : i32, i32
  }
}

</mosaic_0001>

<llo_original>
// kernel: encoder_forward.1
$region0: #{encoder_forward.1}
  #allocation0 [shape = 'u32[]', space=smem, size = 0x4, offset = 0x4, fixed_abs, tag = 'smem constant byte address 0x4 - core index']
  #allocation1 [shape = 'u32[144,128]{1,0:T(1,128)}', space=vmem, size = 0x12000, scoped, tag = 'internal scratch']
  #allocation2 [shape = 'f32[16,32]{1,0:T(8,128)}', space=vmem, size = 0x2000, scoped, tag = 'scratch operand']
  %s0 = inlined_call_operand.vmem [shape: f32[16,32], index: 0, kind: input, shape index: {}]
  %s1 = inlined_call_operand.vmem [shape: f32[16,16], index: 1, kind: input, shape index: {}]
  %s2 = inlined_call_operand.vmem [shape: f32[6,32,96], index: 2, kind: input, shape index: {}]
  %s3 = inlined_call_operand.hbm [shape: f32[6,32,32], index: 3, kind: input, shape index: {}]
  %s4 = inlined_call_operand.vmem [shape: f32[6,1,32], index: 4, kind: input, shape index: {}]
  %s5 = inlined_call_operand.vmem [shape: f32[6,1,32], index: 5, kind: input, shape index: {}]
  %s6 = inlined_call_operand.hbm [shape: f32[6,32,32], index: 6, kind: input, shape index: {}]
  %s7 = inlined_call_operand.vmem [shape: f32[6,1,32], index: 7, kind: input, shape index: {}]
  %s8 = inlined_call_operand.hbm [shape: f32[6,32,32], index: 8, kind: input, shape index: {}]
  %s9 = inlined_call_operand.vmem [shape: f32[6,1,32], index: 9, kind: input, shape index: {}]
  %s10 = inlined_call_operand.vmem [shape: f32[6,1,32], index: 10, kind: input, shape index: {}]
  %s11 = inlined_call_operand.vmem [shape: f32[6,1,32], index: 11, kind: input, shape index: {}]
  %s12 = inlined_call_operand.hbm [shape: f32[16,32], index: 12, kind: output, shape index: {}]
  %s13 = sld [smem:[#allocation0]]
  $region101: #{encoder_forward.1} parent=0
    _
  %s15 = ssub.s32 1, %s13
  %s16 = scalar_select 0, %s15, %s13
  $region1: #{encoder_forward.1} parent=0
    #allocation3 [shape = 'u8[32768]{0}', space=vmem, size = 0x8000, scoped, tag = 'input window, operand 3']
    #allocation4 [shape = 's32[2]{0}', space=sflag, size = 0x8, scoped, tag = 'scoped memory for encoder_forward.1']
    #allocation5 [shape = 's32[2]{0}', space=sflag, size = 0x8, scoped, tag = 'scoped memory for encoder_forward.1']
    #allocation6 [shape = 'u8[32768]{0}', space=vmem, size = 0x8000, scoped, tag = 'input window, operand 6']
    #allocation7 [shape = 's32[2]{0}', space=sflag, size = 0x8, scoped, tag = 'scoped memory for encoder_forward.1']
    #allocation8 [shape = 'u8[32768]{0}', space=vmem, size = 0x8000, scoped, tag = 'input window, operand 8']
    #allocation9 [shape = 'u8[8192]{0}', space=vmem, size = 0x2000, scoped, tag = 'output window, operand 0, single buffered']
    %17 = vsyncpa [#allocation4], 0
    %s18 = scalar_lea.sflag [#allocation4], 1
    %19 = vsyncpa %s18, 0
    %20 = vsyncpa [#allocation7], 0
    %s21 = scalar_lea.sflag [#allocation7], 1
    %22 = vsyncpa %s21, 0
    %23 = vsyncpa [#allocation5], 0
    loop: start=0, step=1, limit=8
    $region2: #{encoder_forward.1} parent=1 // loop_pre_header
      _
    $region3: #{encoder_forward.1} parent=1 // loop_header
      %s25 = sphi 0, %s29
      %p26 = scmp.ge.s32.totalorder %s25, 8
      %s33 = sphi 0, %s33
      %s35 = sphi 0, %s33
      %s36 = sphi 0, %s35
      %s50 = sphi 0, %s36
      %s54 = sphi 0, %s54
      %s56 = sphi 0, %s54
      %s57 = sphi 0, %s56
      %s71 = sphi 0, %s57
      %s77 = sphi 0, %s79
      %s80 = sphi 0, %s77
      %s81 = sphi 0, %s80
      %s97 = sphi 0, %s81
      %s103 = sphi 0, %s105
      %s106 = sphi 0, %s103
      %s107 = sphi 0, %s106
      %s123 = sphi 0, %s107
      %s129 = sphi 0, %s131
      %s132 = sphi 0, %s129
      %s133 = sphi 0, %s132
      %s149 = sphi 0, %s133
      %s155 = sphi 0, %s157
      %s158 = sphi 0, %s155
      %s159 = sphi 0, %s158
      %s175 = sphi 0, %s159
      %s181 = sphi 0, %s183
      %s184 = sphi 0, %s181
      %s185 = sphi 0, %s184
      %s201 = sphi 0, %s185
      %s207 = sphi 0, %s209
      %s210 = sphi 0, %s207
      %s211 = sphi 0, %s210
      %s227 = sphi 0, %s211
      %s233 = sphi 0, %s235
      %s236 = sphi 0, %s233
      %s237 = sphi 0, %s236
      %s253 = sphi 0, %s237
      %s259 = sphi 0, %s261
      %s262 = sphi 0, %s259
      %s263 = sphi 0, %s262
      %s279 = sphi 0, %s263
      %s285 = sphi 0, %s287
      %s288 = sphi 0, %s285
      %s289 = sphi 0, %s288
      %s305 = sphi 0, %s289
      %s311 = sphi 0, %s313
      %s314 = sphi 0, %s311
      %s315 = sphi 0, %s314
      %s331 = sphi 0, %s315
      %s335 = sphi 0, %s335
      %s337 = sphi 0, %s335
      %s338 = sphi 0, %s337
      %s352 = sphi 0, %s338
    $region4: #{encoder_forward.1} parent=1 // loop_header_branch
      %28 = sbr.rel (%p26) target = $region8
    $region5: #{encoder_forward.1} parent=1 // loop_body
      %s30 = ssub.s32 %s25, 1
      %s31 = ssub.s32 %s25, 2
      %s32 = sadd.s32 %s25, 1
      %s34 = sadd.s32 %s33, 1
      %p37 = scmp.eq.s32.totalorder %s25, 5
      %p38 = scmp.ne.s32.totalorder %s33, %s35
      %p39 = scmp.eq.s32.totalorder %s25, 0
      %p40 = por %p38, %p39
      %p41 = scmp.ne.s32.totalorder %s33, %s35
      %p42 = scmp.eq.s32.totalorder %s30, 5
      %p43 = por %p41, %p42
      %p44 = scmp.ne.s32.totalorder %s35, %s36
      %p45 = scmp.eq.s32.totalorder %s30, 0
      %p46 = por %p44, %p45
      %p47 = scmp.ne.s32.totalorder %s35, %s36
      %p48 = scmp.eq.s32.totalorder %s31, 5
      %p49 = por %p47, %p48
      %p51 = scmp.ne.s32.totalorder %s36, %s50
      %p52 = scmp.eq.s32.totalorder %s31, 0
      %p53 = por %p51, %p52
      %s55 = sadd.s32 %s54, 1
      %p58 = scmp.eq.s32.totalorder %s25, 5
      %p59 = scmp.ne.s32.totalorder %s54, %s56
      %p60 = scmp.eq.s32.totalorder %s25, 0
      %p61 = por %p59, %p60
      %p62 = scmp.ne.s32.totalorder %s54, %s56
      %p63 = scmp.eq.s32.totalorder %s30, 5
      %p64 = por %p62, %p63
      %p65 = scmp.ne.s32.totalorder %s56, %s57
      %p66 = scmp.eq.s32.totalorder %s30, 0
      %p67 = por %p65, %p66
      %p68 = scmp.ne.s32.totalorder %s56, %s57
      %p69 = scmp.eq.s32.totalorder %s31, 5
      %p70 = por %p68, %p69
      %p72 = scmp.ne.s32.totalorder %s57, %s71
      %p73 = scmp.eq.s32.totalorder %s31, 0
      %p74 = por %p72, %p73
      %s75 = ssub.s32 %s25, %s32
      %p76 = scmp.eq.s32.totalorder %s75, 0
      %s78 = sadd.s32 %s77, 1
      %s79 = scalar_select %p76, %s77, %s78
      %p82 = pneg %p76
      %p83 = scmp.eq.s32.totalorder %s25, 5
      %p84 = por %p82, %p83
      %p85 = scmp.ne.s32.totalorder %s77, %s80
      %p86 = scmp.eq.s32.totalorder %s25, 0
      %p87 = por %p85, %p86
      %p88 = scmp.ne.s32.totalorder %s77, %s80
      %p89 = scmp.eq.s32.totalorder %s30, 5
      %p90 = por %p88, %p89
      %p91 = scmp.ne.s32.totalorder %s80, %s81
      %p92 = scmp.eq.s32.totalorder %s30, 0
      %p93 = por %p91, %p92
      %p94 = scmp.ne.s32.totalorder %s80, %s81
      %p95 = scmp.eq.s32.totalorder %s31, 5
      %p96 = por %p94, %p95
      %p98 = scmp.ne.s32.totalorder %s81, %s97
      %p99 = scmp.eq.s32.totalorder %s31, 0
      %p100 = por %p98, %p99
      %s101 = ssub.s32 %s25, %s32
      %p102 = scmp.eq.s32.totalorder %s101, 0
      %s104 = sadd.s32 %s103, 1
      %s105 = scalar_select %p102, %s103, %s104
      %p108 = pneg %p102
      %p109 = scmp.eq.s32.totalorder %s25, 5
      %p110 = por %p108, %p109
      %p111 = scmp.ne.s32.totalorder %s103, %s106
      %p112 = scmp.eq.s32.totalorder %s25, 0
      %p113 = por %p111, %p112
      %p114 = scmp.ne.s32.totalorder %s103, %s106
      %p115 = scmp.eq.s32.totalorder %s30, 5
      %p116 = por %p114, %p115
      %p117 = scmp.ne.s32.totalorder %s106, %s107
      %p118 = scmp.eq.s32.totalorder %s30, 0
      %p119 = por %p117, %p118
      %p120 = scmp.ne.s32.totalorder %s106, %s107
      %p121 = scmp.eq.s32.totalorder %s31, 5
      %p122 = por %p120, %p121
      %p124 = scmp.ne.s32.totalorder %s107, %s123
      %p125 = scmp.eq.s32.totalorder %s31, 0
      %p126 = por %p124, %p125
      %s127 = ssub.s32 %s25, %s32
      %p128 = scmp.eq.s32.totalorder %s127, 0
      %s130 = sadd.s32 %s129, 1
      %s131 = scalar_select %p128, %s129, %s130
      %p134 = pneg %p128
      %p135 = scmp.eq.s32.totalorder %s25, 5
      %p136 = por %p134, %p135
      %p137 = scmp.ne.s32.totalorder %s129, %s132
      %p138 = scmp.eq.s32.totalorder %s25, 0
      %p139 = por %p137, %p138
      %p140 = scmp.ne.s32.totalorder %s129, %s132
      %p141 = scmp.eq.s32.totalorder %s30, 5
      %p142 = por %p140, %p141
      %p143 = scmp.ne.s32.totalorder %s132, %s133
      %p144 = scmp.eq.s32.totalorder %s30, 0
      %p145 = por %p143, %p144
      %p146 = scmp.ne.s32.totalorder %s132, %s133
      %p147 = scmp.eq.s32.totalorder %s31, 5
      %p148 = por %p146, %p147
      %p150 = scmp.ne.s32.totalorder %s133, %s149
      %p151 = scmp.eq.s32.totalorder %s31, 0
      %p152 = por %p150, %p151
      %s153 = ssub.s32 %s25, %s32
      %p154 = scmp.eq.s32.totalorder %s153, 0
      %s156 = sadd.s32 %s155, 1
      %s157 = scalar_select %p154, %s155, %s156
      %p160 = pneg %p154
      %p161 = scmp.eq.s32.totalorder %s25, 5
      %p162 = por %p160, %p161
      %p163 = scmp.ne.s32.totalorder %s155, %s158
      %p164 = scmp.eq.s32.totalorder %s25, 0
      %p165 = por %p163, %p164
      %p166 = scmp.ne.s32.totalorder %s155, %s158
      %p167 = scmp.eq.s32.totalorder %s30, 5
      %p168 = por %p166, %p167
      %p169 = scmp.ne.s32.totalorder %s158, %s159
      %p170 = scmp.eq.s32.totalorder %s30, 0
      %p171 = por %p169, %p170
      %p172 = scmp.ne.s32.totalorder %s158, %s159
      %p173 = scmp.eq.s32.totalorder %s31, 5
      %p174 = por %p172, %p173
      %p176 = scmp.ne.s32.totalorder %s159, %s175
      %p177 = scmp.eq.s32.totalorder %s31, 0
      %p178 = por %p176, %p177
      %s179 = ssub.s32 %s25, %s32
      %p180 = scmp.eq.s32.totalorder %s179, 0
      %s182 = sadd.s32 %s181, 1
      %s183 = scalar_select %p180, %s181, %s182
      %p186 = pneg %p180
      %p187 = scmp.eq.s32.totalorder %s25, 5
      %p188 = por %p186, %p187
      %p189 = scmp.ne.s32.totalorder %s181, %s184
      %p190 = scmp.eq.s32.totalorder %s25, 0
      %p191 = por %p189, %p190
      %p192 = scmp.ne.s32.totalorder %s181, %s184
      %p193 = scmp.eq.s32.totalorder %s30, 5
      %p194 = por %p192, %p193
      %p195 = scmp.ne.s32.totalorder %s184, %s185
      %p196 = scmp.eq.s32.totalorder %s30, 0
      %p197 = por %p195, %p196
      %p198 = scmp.ne.s32.totalorder %s184, %s185
      %p199 = scmp.eq.s32.totalorder %s31, 5
      %p200 = por %p198, %p199
      %p202 = scmp.ne.s32.totalorder %s185, %s201
      %p203 = scmp.eq.s32.totalorder %s31, 0
      %p204 = por %p202, %p203
      %s205 = ssub.s32 %s25, %s32
      %p206 = scmp.eq.s32.totalorder %s205, 0
      %s208 = sadd.s32 %s207, 1
      %s209 = scalar_select %p206, %s207, %s208
      %p212 = pneg %p206
      %p213 = scmp.eq.s32.totalorder %s25, 5
      %p214 = por %p212, %p213
      %p215 = scmp.ne.s32.totalorder %s207, %s210
      %p216 = scmp.eq.s32.totalorder %s25, 0
      %p217 = por %p215, %p216
      %p218 = scmp.ne.s32.totalorder %s207, %s210
      %p219 = scmp.eq.s32.totalorder %s30, 5
      %p220 = por %p218, %p219
      %p221 = scmp.ne.s32.totalorder %s210, %s211
      %p222 = scmp.eq.s32.totalorder %s30, 0
      %p223 = por %p221, %p222
      %p224 = scmp.ne.s32.totalorder %s210, %s211
      %p225 = scmp.eq.s32.totalorder %s31, 5
      %p226 = por %p224, %p225
      %p228 = scmp.ne.s32.totalorder %s211, %s227
      %p229 = scmp.eq.s32.totalorder %s31, 0
      %p230 = por %p228, %p229
      %s231 = ssub.s32 %s25, %s32
      %p232 = scmp.eq.s32.totalorder %s231, 0
      %s234 = sadd.s32 %s233, 1
      %s235 = scalar_select %p232, %s233, %s234
      %p238 = pneg %p232
      %p239 = scmp.eq.s32.totalorder %s25, 5
      %p240 = por %p238, %p239
      %p241 = scmp.ne.s32.totalorder %s233, %s236
      %p242 = scmp.eq.s32.totalorder %s25, 0
      %p243 = por %p241, %p242
      %p244 = scmp.ne.s32.totalorder %s233, %s236
      %p245 = scmp.eq.s32.totalorder %s30, 5
      %p246 = por %p244, %p245
      %p247 = scmp.ne.s32.totalorder %s236, %s237
      %p248 = scmp.eq.s32.totalorder %s30, 0
      %p249 = por %p247, %p248
      %p250 = scmp.ne.s32.totalorder %s236, %s237
      %p251 = scmp.eq.s32.totalorder %s31, 5
      %p252 = por %p250, %p251
      %p254 = scmp.ne.s32.totalorder %s237, %s253
      %p255 = scmp.eq.s32.totalorder %s31, 0
      %p256 = por %p254, %p255
      %s257 = ssub.s32 %s25, %s32
      %p258 = scmp.eq.s32.totalorder %s257, 0
      %s260 = sadd.s32 %s259, 1
      %s261 = scalar_select %p258, %s259, %s260
      %p264 = pneg %p258
      %p265 = scmp.eq.s32.totalorder %s25, 5
      %p266 = por %p264, %p265
      %p267 = scmp.ne.s32.totalorder %s259, %s262
      %p268 = scmp.eq.s32.totalorder %s25, 0
      %p269 = por %p267, %p268
      %p270 = scmp.ne.s32.totalorder %s259, %s262
      %p271 = scmp.eq.s32.totalorder %s30, 5
      %p272 = por %p270, %p271
      %p273 = scmp.ne.s32.totalorder %s262, %s263
      %p274 = scmp.eq.s32.totalorder %s30, 0
      %p275 = por %p273, %p274
      %p276 = scmp.ne.s32.totalorder %s262, %s263
      %p277 = scmp.eq.s32.totalorder %s31, 5
      %p278 = por %p276, %p277
      %p280 = scmp.ne.s32.totalorder %s263, %s279
      %p281 = scmp.eq.s32.totalorder %s31, 0
      %p282 = por %p280, %p281
      %s283 = ssub.s32 %s25, %s32
      %p284 = scmp.eq.s32.totalorder %s283, 0
      %s286 = sadd.s32 %s285, 1
      %s287 = scalar_select %p284, %s285, %s286
      %p290 = pneg %p284
      %p291 = scmp.eq.s32.totalorder %s25, 5
      %p292 = por %p290, %p291
      %p293 = scmp.ne.s32.totalorder %s285, %s288
      %p294 = scmp.eq.s32.totalorder %s25, 0
      %p295 = por %p293, %p294
      %p296 = scmp.ne.s32.totalorder %s285, %s288
      %p297 = scmp.eq.s32.totalorder %s30, 5
      %p298 = por %p296, %p297
      %p299 = scmp.ne.s32.totalorder %s288, %s289
      %p300 = scmp.eq.s32.totalorder %s30, 0
      %p301 = por %p299, %p300
      %p302 = scmp.ne.s32.totalorder %s288, %s289
      %p303 = scmp.eq.s32.totalorder %s31, 5
      %p304 = por %p302, %p303
      %p306 = scmp.ne.s32.totalorder %s289, %s305
      %p307 = scmp.eq.s32.totalorder %s31, 0
      %p308 = por %p306, %p307
      %s309 = ssub.s32 %s25, %s32
      %p310 = scmp.eq.s32.totalorder %s309, 0
      %s312 = sadd.s32 %s311, 1
      %s313 = scalar_select %p310, %s311, %s312
      %p316 = pneg %p310
      %p317 = scmp.eq.s32.totalorder %s25, 5
      %p318 = por %p316, %p317
      %p319 = scmp.ne.s32.totalorder %s311, %s314
      %p320 = scmp.eq.s32.totalorder %s25, 0
      %p321 = por %p319, %p320
      %p322 = scmp.ne.s32.totalorder %s311, %s314
      %p323 = scmp.eq.s32.totalorder %s30, 5
      %p324 = por %p322, %p323
      %p325 = scmp.ne.s32.totalorder %s314, %s315
      %p326 = scmp.eq.s32.totalorder %s30, 0
      %p327 = por %p325, %p326
      %p328 = scmp.ne.s32.totalorder %s314, %s315
      %p329 = scmp.eq.s32.totalorder %s31, 5
      %p330 = por %p328, %p329
      %p332 = scmp.ne.s32.totalorder %s315, %s331
      %p333 = scmp.eq.s32.totalorder %s31, 0
      %p334 = por %p332, %p333
      %s336 = sadd.s32 %s335, 1
      %p339 = scmp.eq.s32.totalorder %s25, 5
      %p340 = scmp.ne.s32.totalorder %s335, %s337
      %p341 = scmp.eq.s32.totalorder %s25, 0
      %p342 = por %p340, %p341
      %p343 = scmp.ne.s32.totalorder %s335, %s337
      %p344 = scmp.eq.s32.totalorder %s30, 5
      %p345 = por %p343, %p344
      %p346 = scmp.ne.s32.totalorder %s337, %s338
      %p347 = scmp.eq.s32.totalorder %s30, 0
      %p348 = por %p346, %p347
      %p349 = scmp.ne.s32.totalorder %s337, %s338
      %p350 = scmp.eq.s32.totalorder %s31, 5
      %p351 = por %p349, %p350
      %p353 = scmp.ne.s32.totalorder %s338, %s352
      %p354 = scmp.eq.s32.totalorder %s31, 0
      %p355 = por %p353, %p354
      %p356 = scmp.le.s32.totalorder 1, %s25
      %p357 = scmp.lt.s32.totalorder %s25, 7
      %p358 = pnand %p356, %p357
      %p359 = pneg %p358
      // Predicated region
      $region9: #{encoder_forward.1} parent=5 // pred_check
        _
      $region10: #{encoder_forward.1} parent=5 // pred_check_branch
        %361 = sbr.rel (%p358) target = $region12
      $region11: #{encoder_forward.1} parent=5 // pred_region
        %s362 = ssub.s32 %s25, 1
        // Predicated region
        $region13: #{encoder_forward.1} parent=11 // pred_check
          %p363 = pneg %p46
        $region14: #{encoder_forward.1} parent=11 // pred_check_branch
          %365 = sbr.rel (%p363) target = $region16
        $region15: #{encoder_forward.1} parent=11 // pred_region
          _
        $region16: #{encoder_forward.1} parent=11 // pred_fallthru
          _
        // Predicated region
        $region17: #{encoder_forward.1} parent=11 // pred_check
          %p366 = pneg %p67
        $region18: #{encoder_forward.1} parent=11 // pred_check_branch
          %368 = sbr.rel (%p366) target = $region20
        $region19: #{encoder_forward.1} parent=11 // pred_region
          _
        $region20: #{encoder_forward.1} parent=11 // pred_fallthru
          _
      $region12: #{encoder_forward.1} parent=5 // pred_fallthru
        _
      %p369 = scmp.lt.s32.totalorder %s25, 6
      // Predicated region
      $region21: #{encoder_forward.1} parent=5 // pred_check
        %p370 = pneg %p369
      $region22: #{encoder_forward.1} parent=5 // pred_check_branch
        %372 = sbr.rel (%p370) target = $region24
      $region23: #{encoder_forward.1} parent=5 // pred_region
        // Predicated region
        $region25: #{encoder_forward.1} parent=23 // pred_check
          %p373 = pneg %p87
        $region26: #{encoder_forward.1} parent=23 // pred_check_branch
          %375 = sbr.rel (%p373) target = $region28
        $region27: #{encoder_forward.1} parent=23 // pred_region
          %p376 = scmp.lt.s32.totalorder %s25, 5
          %s377 = scalar_select %p376, %s25, 5
          %s378 = smul.addr %s377, 4
          %s379 = smul.addr %s378, 8
          %s380 = scalar_lea.vmem %s2, %s379
        $region28: #{encoder_forward.1} parent=23 // pred_fallthru
          _
        // Predicated region
        $region29: #{encoder_forward.1} parent=23 // pred_check
          %p381 = pneg %p113
        $region30: #{encoder_forward.1} parent=23 // pred_check_branch
          %383 = sbr.rel (%p381) target = $region32
        $region31: #{encoder_forward.1} parent=23 // pred_region
          %s384 = sand.u32 %s103, 1
          %s385 = scalar_lea.sflag [#allocation4], %s384
          %s386 = sand.u32 %s103, 1
          %s387 = smul.addr %s386, 32
          %s388 = scalar_lea.vmem [#allocation3], %s387
          %s390 = ssub.s32 512, 512
          %391 = vsyncadd %s385, %s390
          %s392 = smul.addr %s25, 4
          %s393 = smul.addr %s392, 128
          %s394 = scalar_lea.hbm %s3, %s393
          %s395 = sshll.u32 %s388, 4
          %s396 = int_to_ptr.vmem [resolvable:$true] %s395
          %401 = dma.hbm_to_vmem [thread:$0]  %s394, 512, %s396, %s385, 128, 128, 8
        $region32: #{encoder_forward.1} parent=23 // pred_fallthru
          _
        // Predicated region
        $region33: #{encoder_forward.1} parent=23 // pred_check
          %p402 = pneg %p139
        $region34: #{encoder_forward.1} parent=23 // pred_check_branch
          %404 = sbr.rel (%p402) target = $region36
        $region35: #{encoder_forward.1} parent=23 // pred_region
          %p405 = scmp.lt.s32.totalorder %s25, 5
          %s406 = scalar_select %p405, %s25, 5
          %s407 = scalar_lea.vmem %s4, %s406
        $region36: #{encoder_forward.1} parent=23 // pred_fallthru
          _
        // Predicated region
        $region37: #{encoder_forward.1} parent=23 // pred_check
          %p408 = pneg %p165
        $region38: #{encoder_forward.1} parent=23 // pred_check_branch
          %410 = sbr.rel (%p408) target = $region40
        $region39: #{encoder_forward.1} parent=23 // pred_region
          %p411 = scmp.lt.s32.totalorder %s25, 5
          %s412 = scalar_select %p411, %s25, 5
          %s413 = scalar_lea.vmem %s5, %s412
        $region40: #{encoder_forward.1} parent=23 // pred_fallthru
          _
        // Predicated region
        $region41: #{encoder_forward.1} parent=23 // pred_check
          %p414 = pneg %p191
        $region42: #{encoder_forward.1} parent=23 // pred_check_branch
          %416 = sbr.rel (%p414) target = $region44
        $region43: #{encoder_forward.1} parent=23 // pred_region
          %s417 = sand.u32 %s25, 1
          %s418 = scalar_lea.sflag [#allocation7], %s417
          %s419 = sand.u32 %s181, 1
          %s420 = smul.addr %s419, 32
          %s421 = scalar_lea.vmem [#allocation6], %s420
          %s423 = ssub.s32 512, 512
          %424 = vsyncadd %s418, %s423
          %s425 = smul.addr %s25, 4
          %s426 = smul.addr %s425, 128
          %s427 = scalar_lea.hbm %s6, %s426
          %s428 = sshll.u32 %s421, 4
          %s429 = int_to_ptr.vmem [resolvable:$true] %s428
          %434 = dma.hbm_to_vmem [thread:$0]  %s427, 512, %s429, %s418, 128, 128, 8
        $region44: #{encoder_forward.1} parent=23 // pred_fallthru
          _
        // Predicated region
        $region45: #{encoder_forward.1} parent=23 // pred_check
          %p435 = pneg %p217
        $region46: #{encoder_forward.1} parent=23 // pred_check_branch
          %437 = sbr.rel (%p435) target = $region48
        $region47: #{encoder_forward.1} parent=23 // pred_region
          %p438 = scmp.lt.s32.totalorder %s25, 5
          %s439 = scalar_select %p438, %s25, 5
          %s440 = scalar_lea.vmem %s7, %s439
        $region48: #{encoder_forward.1} parent=23 // pred_fallthru
          _
        // Predicated region
        $region49: #{encoder_forward.1} parent=23 // pred_check
          %p441 = pneg %p243
        $region50: #{encoder_forward.1} parent=23 // pred_check_branch
          %443 = sbr.rel (%p441) target = $region52
        $region51: #{encoder_forward.1} parent=23 // pred_region
          %s444 = sand.u32 %s25, 1
          %s445 = scalar_lea.sflag [#allocation7], %s444
          %s446 = sand.u32 %s233, 1
          %s447 = smul.addr %s446, 32
          %s448 = scalar_lea.vmem [#allocation8], %s447
          %s450 = ssub.s32 512, 512
          %451 = vsyncadd %s445, %s450
          %s452 = smul.addr %s25, 4
          %s453 = smul.addr %s452, 128
          %s454 = scalar_lea.hbm %s8, %s453
          %s455 = sshll.u32 %s448, 4
          %s456 = int_to_ptr.vmem [resolvable:$true] %s455
          %461 = dma.hbm_to_vmem [thread:$0]  %s454, 512, %s456, %s445, 128, 128, 8
        $region52: #{encoder_forward.1} parent=23 // pred_fallthru
          _
        // Predicated region
        $region53: #{encoder_forward.1} parent=23 // pred_check
          %p462 = pneg %p269
        $region54: #{encoder_forward.1} parent=23 // pred_check_branch
          %464 = sbr.rel (%p462) target = $region56
        $region55: #{encoder_forward.1} parent=23 // pred_region
          %p465 = scmp.lt.s32.totalorder %s25, 5
          %s466 = scalar_select %p465, %s25, 5
          %s467 = scalar_lea.vmem %s9, %s466
        $region56: #{encoder_forward.1} parent=23 // pred_fallthru
          _
        // Predicated region
        $region57: #{encoder_forward.1} parent=23 // pred_check
          %p468 = pneg %p295
        $region58: #{encoder_forward.1} parent=23 // pred_check_branch
          %470 = sbr.rel (%p468) target = $region60
        $region59: #{encoder_forward.1} parent=23 // pred_region
          %p471 = scmp.lt.s32.totalorder %s25, 5
          %s472 = scalar_select %p471, %s25, 5
          %s473 = scalar_lea.vmem %s10, %s472
        $region60: #{encoder_forward.1} parent=23 // pred_fallthru
          _
        // Predicated region
        $region61: #{encoder_forward.1} parent=23 // pred_check
          %p474 = pneg %p321
        $region62: #{encoder_forward.1} parent=23 // pred_check_branch
          %476 = sbr.rel (%p474) target = $region64
        $region63: #{encoder_forward.1} parent=23 // pred_region
          %p477 = scmp.lt.s32.totalorder %s25, 5
          %s478 = scalar_select %p477, %s25, 5
          %s479 = scalar_lea.vmem %s11, %s478
        $region64: #{encoder_forward.1} parent=23 // pred_fallthru
          _
      $region24: #{encoder_forward.1} parent=5 // pred_fallthru
        _
      %p480 = scmp.le.s32.totalorder 1, %s25
      %p481 = scmp.lt.s32.totalorder %s25, 7
      %p482 = pnand %p480, %p481
      %p483 = pneg %p482
      // Predicated region
      $region65: #{encoder_forward.1} parent=5 // pred_check
        _
      $region66: #{encoder_forward.1} parent=5 // pred_check_branch
        %485 = sbr.rel (%p482) target = $region68
      $region67: #{encoder_forward.1} parent=5 // pred_region
        %s486 = ssub.s32 %s25, 1
        %s487 = sand.u32 %s106, 1
        %s488 = scalar_lea.sflag [#allocation4], %s487
        %s489 = sand.u32 %s106, 1
        %s490 = smul.addr %s489, 32
        %s491 = scalar_lea.vmem [#allocation3], %s490
        // Predicated region
        $region69: #{encoder_forward.1} parent=67 // pred_check
          %p492 = pneg %p119
        $region70: #{encoder_forward.1} parent=67 // pred_check_branch
          %494 = sbr.rel (%p492) target = $region72
        $region71: #{encoder_forward.1} parent=67 // pred_region
          %495 = dma.done %s488, 512
        $region72: #{encoder_forward.1} parent=67 // pred_fallthru
          _
        %s496 = sand.u32 %s30, 1
        %s497 = scalar_lea.sflag [#allocation7], %s496
        %s498 = sand.u32 %s184, 1
        %s499 = smul.addr %s498, 32
        %s500 = scalar_lea.vmem [#allocation6], %s499
        // Predicated region
        $region73: #{encoder_forward.1} parent=67 // pred_check
          %p501 = pneg %p197
        $region74: #{encoder_forward.1} parent=67 // pred_check_branch
          %503 = sbr.rel (%p501) target = $region76
        $region75: #{encoder_forward.1} parent=67 // pred_region
          %504 = dma.done %s497, 512
        $region76: #{encoder_forward.1} parent=67 // pred_fallthru
          _
        %s505 = sand.u32 %s30, 1
        %s506 = scalar_lea.sflag [#allocation7], %s505
        %s507 = sand.u32 %s236, 1
        %s508 = smul.addr %s507, 32
        %s509 = scalar_lea.vmem [#allocation8], %s508
        // Predicated region
        $region77: #{encoder_forward.1} parent=67 // pred_check
          %p510 = pneg %p249
        $region78: #{encoder_forward.1} parent=67 // pred_check_branch
          %512 = sbr.rel (%p510) target = $region80
        $region79: #{encoder_forward.1} parent=67 // pred_region
          %513 = dma.done %s506, 512
        $region80: #{encoder_forward.1} parent=67 // pred_fallthru
          _
        %p514 = pneg %p46
        %p515 = pneg %p43
        %p516 = pneg %p67
        %p517 = pneg %p64
        %p518 = scmp.lt.s32.totalorder %s30, 5
        %s519 = scalar_select %p518, %s30, 5
        %s520 = smul.addr %s519, 4
        %s521 = smul.addr %s520, 8
        %s522 = scalar_lea.vmem %s2, %s521
        %p523 = pneg %p93
        %p524 = pneg %p90
        %s525 = sand.u32 %s106, 1
        %s526 = scalar_lea.sflag [#allocation4], %s525
        %s527 = sand.u32 %s106, 1
        %s528 = smul.addr %s527, 32
        %s529 = scalar_lea.vmem [#allocation3], %s528
        %p530 = pneg %p119
        %p531 = pneg %p116
        %p532 = scmp.lt.s32.totalorder %s30, 5
        %s533 = scalar_select %p532, %s30, 5
        %s534 = scalar_lea.vmem %s4, %s533
        %p535 = pneg %p145
        %p536 = pneg %p142
        %p537 = scmp.lt.s32.totalorder %s30, 5
        %s538 = scalar_select %p537, %s30, 5
        %s539 = scalar_lea.vmem %s5, %s538
        %p540 = pneg %p171
        %p541 = pneg %p168
        %s542 = sand.u32 %s30, 1
        %s543 = scalar_lea.sflag [#allocation7], %s542
        %s544 = sand.u32 %s184, 1
        %s545 = smul.addr %s544, 32
        %s546 = scalar_lea.vmem [#allocation6], %s545
        %p547 = pneg %p197
        %p548 = pneg %p194
        %p549 = scmp.lt.s32.totalorder %s30, 5
        %s550 = scalar_select %p549, %s30, 5
        %s551 = scalar_lea.vmem %s7, %s550
        %p552 = pneg %p223
        %p553 = pneg %p220
        %s554 = sand.u32 %s30, 1
        %s555 = scalar_lea.sflag [#allocation7], %s554
        %s556 = sand.u32 %s236, 1
        %s557 = smul.addr %s556, 32
        %s558 = scalar_lea.vmem [#allocation8], %s557
        %p559 = pneg %p249
        %p560 = pneg %p246
        %p561 = scmp.lt.s32.totalorder %s30, 5
        %s562 = scalar_select %p561, %s30, 5
        %s563 = scalar_lea.vmem %s9, %s562
        %p564 = pneg %p275
        %p565 = pneg %p272
        %p566 = scmp.lt.s32.totalorder %s30, 5
        %s567 = scalar_select %p566, %s30, 5
        %s568 = scalar_lea.vmem %s10, %s567
        %p569 = pneg %p301
        %p570 = pneg %p298
        %p571 = scmp.lt.s32.totalorder %s30, 5
        %s572 = scalar_select %p571, %s30, 5
        %s573 = scalar_lea.vmem %s11, %s572
        %p574 = pneg %p327
        %p575 = pneg %p324
        %p576 = pneg %p348
        %p577 = pneg %p345
        %p578 = scmp.lt.s32.totalorder %s30, 5
        %s579 = scalar_select %p578, %s30, 5
        %s580 = smul.addr %s579, 4
        %s581 = smul.addr %s580, 8
        %s582 = scalar_lea.vmem %s2, %s581
        %p583 = scmp.lt.s32.totalorder %s30, 5
        %s584 = scalar_select %p583, %s30, 5
        %s585 = scalar_lea.vmem %s4, %s584
        %p586 = scmp.lt.s32.totalorder %s30, 5
        %s587 = scalar_select %p586, %s30, 5
        %s588 = scalar_lea.vmem %s5, %s587
        %p589 = scmp.lt.s32.totalorder %s30, 5
        %s590 = scalar_select %p589, %s30, 5
        %s591 = scalar_lea.vmem %s7, %s590
        %p592 = scmp.lt.s32.totalorder %s30, 5
        %s593 = scalar_select %p592, %s30, 5
        %s594 = scalar_lea.vmem %s9, %s593
        %p595 = scmp.lt.s32.totalorder %s30, 5
        %s596 = scalar_select %p595, %s30, 5
        %s597 = scalar_lea.vmem %s10, %s596
        %p598 = scmp.lt.s32.totalorder %s30, 5
        %s599 = scalar_select %p598, %s30, 5
        %s600 = scalar_lea.vmem %s11, %s599
        %p601 = scmp.eq.s32.totalorder %s30, 0
        // Predicated region
        $region81: #{encoder_forward.1} parent=67 // pred_check
          %p602 = pneg %p601
        $region82: #{encoder_forward.1} parent=67 // pred_check_branch
          %604 = sbr.rel (%p602) target = $region84
        $region83: #{encoder_forward.1} parent=67 // pred_region
          %v605 = vld [vmem:[%s0] sm:$0xff]
          %v606 = vld [vmem:[%s0 + $0x8] sm:$0xff]
          %vm607 = vcmask 261120
          %608 = vst.msk [vmem:[#allocation2] sm:$0xff] %vm607, %v605
          %609 = vst.msk [vmem:[#allocation2 + $0x8] sm:$0xff] %vm607, %v606
        $region84: #{encoder_forward.1} parent=67 // pred_fallthru
          _
        %v610 = vld [vmem:[#allocation2] sm:$0xff]
        %v611 = vld [vmem:[#allocation2 + $0x8] sm:$0xff]
        %v612 = vld [vmem:[%s1] sm:$0xff]
        %v613 = vld [vmem:[%s1 + $0x8] sm:$0xff]
        %vm614 = vcmp.gt.f32.partialorder %v612, 0.5
        %vm615 = vcmp.gt.f32.partialorder %v613, 0.5
        %v616 = vld [vmem:[%s582] sm:$0xff]
        %v617 = vld [vmem:[%s582 + $0x8] sm:$0xff]
        %v618 = vld [vmem:[%s582 + $0x10] sm:$0xff]
        %v619 = vld [vmem:[%s582 + $0x18] sm:$0xff]
        %vm620 = vcmask 261120
        %v622 = vsel %vm620, %v610, 0
        %v625 = vsel %vm620, %v611, 0
        %627 = vmatprep.subr.mxu0 0.0
        %628 = vmatpush1.msra.mxu0 0.0
        %629 = vmatprep.subr.mxu0 0.0
        %630 = vmatpush1.msra.mxu0 0.0
        %631 = vmatprep.subr.mxu0 0.0
        %632 = vmatpush1.msra.mxu0 0.0
        %633 = vmatprep.subr.mxu0 0.0
        %634 = vmatpush1.msra.mxu0 0.0
        %635 = vmatprep.subr.mxu0 0.0
        %636 = vmatpush1.msra.mxu0 0.0
        %637 = vmatprep.subr.mxu0 0.0
        %638 = vmatpush1.msra.mxu0 0.0
        %639 = vmatprep.subr.mxu0 0.0
        %640 = vmatpush1.msra.mxu0 0.0
        %641 = vmatprep.subr.mxu0 0.0
        %642 = vmatpush1.msra.mxu0 0.0
        %643 = vmatprep.subr.mxu0 0.0
        %644 = vmatpush1.msra.mxu0 0.0
        %645 = vmatprep.subr.mxu0 0.0
        %646 = vmatpush1.msra.mxu0 0.0
        %647 = vmatprep.subr.mxu0 0.0
        %648 = vmatpush1.msra.mxu0 0.0
        %649 = vmatprep.subr.mxu0 0.0
        %650 = vmatpush1.msra.mxu0 0.0
        %651 = vmatprep.subr.mxu0 0.0
        %652 = vmatpush1.msra.mxu0 %v619
        %653 = vmatprep.subr.mxu0 0.0
        %654 = vmatpush1.msra.mxu0 %v618
        %655 = vmatprep.subr.mxu0 0.0
        %656 = vmatpush1.msra.mxu0 %v617
        %657 = vmatprep.subr.mxu0 0.0
        %658 = vmatpush1.msra.mxu0 %v616
        %659 = vmatprep.subr.mxu0 0.0
        %660 = vmatpush2.msra.mxu0 0.0
        %661 = vmatprep.subr.mxu0 0.0
        %662 = vmatpush2.msra.mxu0 0.0
        %663 = vmatprep.subr.mxu0 0.0
        %664 = vmatpush2.msra.mxu0 0.0
        %665 = vmatprep.subr.mxu0 0.0
        %666 = vmatpush2.msra.mxu0 0.0
        %667 = vmatprep.subr.mxu0 0.0
        %668 = vmatpush2.msra.mxu0 0.0
        %669 = vmatprep.subr.mxu0 0.0
        %670 = vmatpush2.msra.mxu0 0.0
        %671 = vmatprep.subr.mxu0 0.0
        %672 = vmatpush2.msra.mxu0 0.0
        %673 = vmatprep.subr.mxu0 0.0
        %674 = vmatpush2.msra.mxu0 0.0
        %675 = vmatprep.subr.mxu0 0.0
        %676 = vmatpush2.msra.mxu0 0.0
        %677 = vmatprep.subr.mxu0 0.0
        %678 = vmatpush2.msra.mxu0 0.0
        %679 = vmatprep.subr.mxu0 0.0
        %680 = vmatpush2.msra.mxu0 0.0
        %681 = vmatprep.subr.mxu0 0.0
        %682 = vmatpush2.msra.mxu0 0.0
        %683 = vmatprep.subr.mxu0 0.0
        %684 = vmatpush2.msra.mxu0 0.0
        %685 = vmatprep.subr.mxu0 0.0
        %686 = vmatpush2.msra.mxu0 0.0
        %687 = vmatprep.subr.mxu0 0.0
        %688 = vmatpush2.msra.mxu0 0.0
        %689 = vmatprep.subr.mxu0 0.0
        %690 = vmatpush2.msra.mxu0 0.0
        %691 = vmatprep.mubr.f32.mxu0 0.0
        %692 = vmatmul.mubr.f32.gmra.mxu0 %v622
        %v693 = vpop.f32.mrf.mxu0
        %v694 = vadd.f32 0.0, %v693
        %v695 = vpop.f32.mrf.mxu0
        %696 = vmatprep.mubr.f32.mxu0 0.0
        %697 = vmatmul.mubr.f32.gmra.mxu0 %v625
        %v698 = vpop.f32.mrf.mxu0
        %v699 = vadd.f32 0.0, %v698
        %v700 = vpop.f32.mrf.mxu0
        %701 = vdwg.mxu0
        %v702 = vld [vmem:[%s491] sm:$0xff]
        %v703 = vld [vmem:[%s491 + $0x8] sm:$0xff]
        %v704 = vld [vmem:[%s491 + $0x10] sm:$0xff]
        %v705 = vld [vmem:[%s491 + $0x18] sm:$0xff]
        %708 = vrot.lane.b32.xlu0 %v694, 96
        %v709 = vpop.permute.xlu0 %708
        %710 = vrot.lane.b32.xlu0 %v699, 96
        %v711 = vpop.permute.xlu0 %710
        %vm712 = vcmask 130048
        %v713 = vsel %vm712, %v694, 0
        %v715 = vsel %vm712, %v699, 0
        %v717 = vsel %vm712, %v709, 0
        %v719 = vsel %vm712, %v711, 0
        %721 = vmatprep.subr.mxu0 0.0
        %722 = vmatpush1.xpose.msra.mxu0 0.0
        %723 = vmatprep.subr.mxu0 0.0
        %724 = vmatpush1.xpose.msra.mxu0 0.0
        %725 = vmatprep.subr.mxu0 0.0
        %726 = vmatpush1.xpose.msra.mxu0 0.0
        %727 = vmatprep.subr.mxu0 0.0
        %728 = vmatpush1.xpose.msra.mxu0 0.0
        %729 = vmatprep.subr.mxu0 0.0
        %730 = vmatpush1.xpose.msra.mxu0 0.0
        %731 = vmatprep.subr.mxu0 0.0
        %732 = vmatpush1.xpose.msra.mxu0 0.0
        %733 = vmatprep.subr.mxu0 0.0
        %734 = vmatpush1.xpose.msra.mxu0 0.0
        %735 = vmatprep.subr.mxu0 0.0
        %736 = vmatpush1.xpose.msra.mxu0 0.0
        %737 = vmatprep.subr.mxu0 0.0
        %738 = vmatpush1.xpose.msra.mxu0 0.0
        %739 = vmatprep.subr.mxu0 0.0
        %740 = vmatpush1.xpose.msra.mxu0 0.0
        %741 = vmatprep.subr.mxu0 0.0
        %742 = vmatpush1.xpose.msra.mxu0 0.0
        %743 = vmatprep.subr.mxu0 0.0
        %744 = vmatpush1.xpose.msra.mxu0 0.0
        %745 = vmatprep.subr.mxu0 0.0
        %746 = vmatpush1.xpose.msra.mxu0 0.0
        %747 = vmatprep.subr.mxu0 0.0
        %748 = vmatpush1.xpose.msra.mxu0 0.0
        %749 = vmatprep.subr.mxu0 0.0
        %750 = vmatpush1.xpose.msra.mxu0 %v719
        %751 = vmatprep.subr.mxu0 0.0
        %752 = vmatpush1.xpose.msra.mxu0 %v717
        %753 = vmatprep.subr.mxu0 0.0
        %754 = vmatpush2.xpose.msra.mxu0 0.0
        %755 = vmatprep.subr.mxu0 0.0
        %756 = vmatpush2.xpose.msra.mxu0 0.0
        %757 = vmatprep.subr.mxu0 0.0
        %758 = vmatpush2.xpose.msra.mxu0 0.0
        %759 = vmatprep.subr.mxu0 0.0
        %760 = vmatpush2.xpose.msra.mxu0 0.0
        %761 = vmatprep.subr.mxu0 0.0
        %762 = vmatpush2.xpose.msra.mxu0 0.0
        %763 = vmatprep.subr.mxu0 0.0
        %764 = vmatpush2.xpose.msra.mxu0 0.0
        %765 = vmatprep.subr.mxu0 0.0
        %766 = vmatpush2.xpose.msra.mxu0 0.0
        %767 = vmatprep.subr.mxu0 0.0
        %768 = vmatpush2.xpose.msra.mxu0 0.0
        %769 = vmatprep.subr.mxu0 0.0
        %770 = vmatpush2.xpose.msra.mxu0 0.0
        %771 = vmatprep.subr.mxu0 0.0
        %772 = vmatpush2.xpose.msra.mxu0 0.0
        %773 = vmatprep.subr.mxu0 0.0
        %774 = vmatpush2.xpose.msra.mxu0 0.0
        %775 = vmatprep.subr.mxu0 0.0
        %776 = vmatpush2.xpose.msra.mxu0 0.0
        %777 = vmatprep.subr.mxu0 0.0
        %778 = vmatpush2.xpose.msra.mxu0 0.0
        %779 = vmatprep.subr.mxu0 0.0
        %780 = vmatpush2.xpose.msra.mxu0 0.0
        %781 = vmatprep.subr.mxu0 0.0
        %782 = vmatpush2.xpose.msra.mxu0 0.0
        %783 = vmatprep.subr.mxu0 0.0
        %784 = vmatpush2.xpose.msra.mxu0 0.0
        %785 = vmatprep.mubr.f32.mxu0 0.0
        %786 = vmatmul.mubr.f32.gmra.mxu0 %v713
        %v787 = vpop.f32.mrf.mxu0
        %v788 = vadd.f32 0.0, %v787
        %v789 = vpop.f32.mrf.mxu0
        %790 = vmatprep.mubr.f32.mxu0 0.0
        %791 = vmatmul.mubr.f32.gmra.mxu0 %v715
        %v792 = vpop.f32.mrf.mxu0
        %v793 = vadd.f32 0.0, %v792
        %v794 = vpop.f32.mrf.mxu0
        %795 = vdwg.mxu0
        %v796 = vmul.f32 %v788, 0.25
        %v797 = vmul.f32 %v793, 0.25
        %v798 = vsel %vm614, -1e+09, %v796
        %v799 = vsel %vm615, -1e+09, %v797
        %v800 = vsel %vm712, %v798, -inf
        %801 = vmax.xlane.f32.xlu0 %v800
        %v802 = vpop.xlane.xlu0 %801
        %v803 = vsel %vm712, %v799, -inf
        %804 = vmax.xlane.f32.xlu0 %v803
        %v805 = vpop.xlane.xlu0 %804
        %v806 = vsub.f32 %v798, %v802
        %v807 = vsub.f32 %v799, %v805
        %v808 = vmul.f32 %v806, 1.442695
        %v809 = vpow.pop %v808
        %v810 = vmul.f32 %v807, 1.442695
        %v811 = vpow.pop %v810
        %v812 = vsel %vm712, %v809, 0.0
        %813 = vadd.xlane.f32.xlu0 %v812
        %v814 = vpop.xlane.xlu0 %813
        %v815 = vsel %vm712, %v811, 0.0
        %816 = vadd.xlane.f32.xlu0 %v815
        %v817 = vpop.xlane.xlu0 %816
        %v818 = vrcp.pop %v814
        %v819 = vrcp.pop %v817
        %v820 = vmul.f32 %v809, %v818
        %v821 = vmul.f32 %v811, %v819
        %822 = vrot.lane.b32.xlu0 %v694, 64
        %v823 = vpop.permute.xlu0 %822
        %824 = vrot.lane.b32.xlu0 %v699, 64
        %v825 = vpop.permute.xlu0 %824
        %v829 = vsel %vm712, %v820, 0
        %v832 = vsel %vm712, %v821, 0
        %834 = vmatprep.subr.mxu0 0.0
        %835 = vmatpush1.msra.mxu0 0.0
        %836 = vmatprep.subr.mxu0 0.0
        %837 = vmatpush1.msra.mxu0 0.0
        %838 = vmatprep.subr.mxu0 0.0
        %839 = vmatpush1.msra.mxu0 0.0
        %840 = vmatprep.subr.mxu0 0.0
        %841 = vmatpush1.msra.mxu0 0.0
        %842 = vmatprep.subr.mxu0 0.0
        %843 = vmatpush1.msra.mxu0 0.0
        %844 = vmatprep.subr.mxu0 0.0
        %845 = vmatpush1.msra.mxu0 0.0
        %846 = vmatprep.subr.mxu0 0.0
        %847 = vmatpush1.msra.mxu0 0.0
        %848 = vmatprep.subr.mxu0 0.0
        %849 = vmatpush1.msra.mxu0 0.0
        %850 = vmatprep.subr.mxu0 0.0
        %851 = vmatpush1.msra.mxu0 0.0
        %852 = vmatprep.subr.mxu0 0.0
        %853 = vmatpush1.msra.mxu0 0.0
        %854 = vmatprep.subr.mxu0 0.0
        %855 = vmatpush1.msra.mxu0 0.0
        %856 = vmatprep.subr.mxu0 0.0
        %857 = vmatpush1.msra.mxu0 0.0
        %858 = vmatprep.subr.mxu0 0.0
        %859 = vmatpush1.msra.mxu0 0.0
        %860 = vmatprep.subr.mxu0 0.0
        %861 = vmatpush1.msra.mxu0 0.0
        %862 = vmatprep.subr.mxu0 0.0
        %863 = vmatpush1.msra.mxu0 %v825
        %864 = vmatprep.subr.mxu0 0.0
        %865 = vmatpush1.msra.mxu0 %v823
        %866 = vmatprep.subr.mxu0 0.0
        %867 = vmatpush2.msra.mxu0 0.0
        %868 = vmatprep.subr.mxu0 0.0
        %869 = vmatpush2.msra.mxu0 0.0
        %870 = vmatprep.subr.mxu0 0.0
        %871 = vmatpush2.msra.mxu0 0.0
        %872 = vmatprep.subr.mxu0 0.0
        %873 = vmatpush2.msra.mxu0 0.0
        %874 = vmatprep.subr.mxu0 0.0
        %875 = vmatpush2.msra.mxu0 0.0
        %876 = vmatprep.subr.mxu0 0.0
        %877 = vmatpush2.msra.mxu0 0.0
        %878 = vmatprep.subr.mxu0 0.0
        %879 = vmatpush2.msra.mxu0 0.0
        %880 = vmatprep.subr.mxu0 0.0
        %881 = vmatpush2.msra.mxu0 0.0
        %882 = vmatprep.subr.mxu0 0.0
        %883 = vmatpush2.msra.mxu0 0.0
        %884 = vmatprep.subr.mxu0 0.0
        %885 = vmatpush2.msra.mxu0 0.0
        %886 = vmatprep.subr.mxu0 0.0
        %887 = vmatpush2.msra.mxu0 0.0
        %888 = vmatprep.subr.mxu0 0.0
        %889 = vmatpush2.msra.mxu0 0.0
        %890 = vmatprep.subr.mxu0 0.0
        %891 = vmatpush2.msra.mxu0 0.0
        %892 = vmatprep.subr.mxu0 0.0
        %893 = vmatpush2.msra.mxu0 0.0
        %894 = vmatprep.subr.mxu0 0.0
        %895 = vmatpush2.msra.mxu0 0.0
        %896 = vmatprep.subr.mxu0 0.0
        %897 = vmatpush2.msra.mxu0 0.0
        %898 = vmatprep.mubr.f32.mxu0 0.0
        %899 = vmatmul.mubr.f32.gmra.mxu0 %v829
        %v900 = vpop.f32.mrf.mxu0
        %v901 = vadd.f32 0.0, %v900
        %v902 = vpop.f32.mrf.mxu0
        %903 = vmatprep.mubr.f32.mxu0 0.0
        %904 = vmatmul.mubr.f32.gmra.mxu0 %v832
        %v905 = vpop.f32.mrf.mxu0
        %v906 = vadd.f32 0.0, %v905
        %v907 = vpop.f32.mrf.mxu0
        %908 = vdwg.mxu0
        %909 = vrot.lane.b32.xlu0 %v694, 112
        %v910 = vpop.permute.xlu0 %909
        %911 = vrot.lane.b32.xlu0 %v699, 112
        %v912 = vpop.permute.xlu0 %911
        %913 = vrot.lane.b32.xlu0 %v694, 80
        %v914 = vpop.permute.xlu0 %913
        %915 = vrot.lane.b32.xlu0 %v699, 80
        %v916 = vpop.permute.xlu0 %915
        %v917 = vsel %vm712, %v910, 0
        %v919 = vsel %vm712, %v912, 0
        %v921 = vsel %vm712, %v914, 0
        %v923 = vsel %vm712, %v916, 0
        %925 = vmatprep.subr.mxu0 0.0
        %926 = vmatpush1.xpose.msra.mxu0 0.0
        %927 = vmatprep.subr.mxu0 0.0
        %928 = vmatpush1.xpose.msra.mxu0 0.0
        %929 = vmatprep.subr.mxu0 0.0
        %930 = vmatpush1.xpose.msra.mxu0 0.0
        %931 = vmatprep.subr.mxu0 0.0
        %932 = vmatpush1.xpose.msra.mxu0 0.0
        %933 = vmatprep.subr.mxu0 0.0
        %934 = vmatpush1.xpose.msra.mxu0 0.0
        %935 = vmatprep.subr.mxu0 0.0
        %936 = vmatpush1.xpose.msra.mxu0 0.0
        %937 = vmatprep.subr.mxu0 0.0
        %938 = vmatpush1.xpose.msra.mxu0 0.0
        %939 = vmatprep.subr.mxu0 0.0
        %940 = vmatpush1.xpose.msra.mxu0 0.0
        %941 = vmatprep.subr.mxu0 0.0
        %942 = vmatpush1.xpose.msra.mxu0 0.0
        %943 = vmatprep.subr.mxu0 0.0
        %944 = vmatpush1.xpose.msra.mxu0 0.0
        %945 = vmatprep.subr.mxu0 0.0
        %946 = vmatpush1.xpose.msra.mxu0 0.0
        %947 = vmatprep.subr.mxu0 0.0
        %948 = vmatpush1.xpose.msra.mxu0 0.0
        %949 = vmatprep.subr.mxu0 0.0
        %950 = vmatpush1.xpose.msra.mxu0 0.0
        %951 = vmatprep.subr.mxu0 0.0
        %952 = vmatpush1.xpose.msra.mxu0 0.0
        %953 = vmatprep.subr.mxu0 0.0
        %954 = vmatpush1.xpose.msra.mxu0 %v923
        %955 = vmatprep.subr.mxu0 0.0
        %956 = vmatpush1.xpose.msra.mxu0 %v921
        %957 = vmatprep.subr.mxu0 0.0
        %958 = vmatpush2.xpose.msra.mxu0 0.0
        %959 = vmatprep.subr.mxu0 0.0
        %960 = vmatpush2.xpose.msra.mxu0 0.0
        %961 = vmatprep.subr.mxu0 0.0
        %962 = vmatpush2.xpose.msra.mxu0 0.0
        %963 = vmatprep.subr.mxu0 0.0
        %964 = vmatpush2.xpose.msra.mxu0 0.0
        %965 = vmatprep.subr.mxu0 0.0
        %966 = vmatpush2.xpose.msra.mxu0 0.0
        %967 = vmatprep.subr.mxu0 0.0
        %968 = vmatpush2.xpose.msra.mxu0 0.0
        %969 = vmatprep.subr.mxu0 0.0
        %970 = vmatpush2.xpose.msra.mxu0 0.0
        %971 = vmatprep.subr.mxu0 0.0
        %972 = vmatpush2.xpose.msra.mxu0 0.0
        %973 = vmatprep.subr.mxu0 0.0
        %974 = vmatpush2.xpose.msra.mxu0 0.0
        %975 = vmatprep.subr.mxu0 0.0
        %976 = vmatpush2.xpose.msra.mxu0 0.0
        %977 = vmatprep.subr.mxu0 0.0
        %978 = vmatpush2.xpose.msra.mxu0 0.0
        %979 = vmatprep.subr.mxu0 0.0
        %980 = vmatpush2.xpose.msra.mxu0 0.0
        %981 = vmatprep.subr.mxu0 0.0
        %982 = vmatpush2.xpose.msra.mxu0 0.0
        %983 = vmatprep.subr.mxu0 0.0
        %984 = vmatpush2.xpose.msra.mxu0 0.0
        %985 = vmatprep.subr.mxu0 0.0
        %986 = vmatpush2.xpose.msra.mxu0 0.0
        %987 = vmatprep.subr.mxu0 0.0
        %988 = vmatpush2.xpose.msra.mxu0 0.0
        %989 = vmatprep.mubr.f32.mxu0 0.0
        %990 = vmatmul.mubr.f32.gmra.mxu0 %v917
        %v991 = vpop.f32.mrf.mxu0
        %v992 = vadd.f32 0.0, %v991
        %v993 = vpop.f32.mrf.mxu0
        %994 = vmatprep.mubr.f32.mxu0 0.0
        %995 = vmatmul.mubr.f32.gmra.mxu0 %v919
        %v996 = vpop.f32.mrf.mxu0
        %v997 = vadd.f32 0.0, %v996
        %v998 = vpop.f32.mrf.mxu0
        %999 = vdwg.mxu0
        %v1000 = vmul.f32 %v992, 0.25
        %v1001 = vmul.f32 %v997, 0.25
        %v1002 = vsel %vm614, -1e+09, %v1000
        %v1003 = vsel %vm615, -1e+09, %v1001
        %v1004 = vsel %vm712, %v1002, -inf
        %1005 = vmax.xlane.f32.xlu0 %v1004
        %v1006 = vpop.xlane.xlu0 %1005
        %v1007 = vsel %vm712, %v1003, -inf
        %1008 = vmax.xlane.f32.xlu0 %v1007
        %v1009 = vpop.xlane.xlu0 %1008
        %v1010 = vsub.f32 %v1002, %v1006
        %v1011 = vsub.f32 %v1003, %v1009
        %v1012 = vmul.f32 %v1010, 1.442695
        %v1013 = vpow.pop %v1012
        %v1014 = vmul.f32 %v1011, 1.442695
        %v1015 = vpow.pop %v1014
        %v1016 = vsel %vm712, %v1013, 0.0
        %1017 = vadd.xlane.f32.xlu0 %v1016
        %v1018 = vpop.xlane.xlu0 %1017
        %v1019 = vsel %vm712, %v1015, 0.0
        %1020 = vadd.xlane.f32.xlu0 %v1019
        %v1021 = vpop.xlane.xlu0 %1020
        %v1022 = vrcp.pop %v1018
        %v1023 = vrcp.pop %v1021
        %v1024 = vmul.f32 %v1013, %v1022
        %v1025 = vmul.f32 %v1015, %v1023
        %1026 = vrot.lane.b32.xlu0 %v694, 48
        %v1027 = vpop.permute.xlu0 %1026
        %1028 = vrot.lane.b32.xlu0 %v699, 48
        %v1029 = vpop.permute.xlu0 %1028
        %v1033 = vsel %vm712, %v1024, 0
        %v1036 = vsel %vm712, %v1025, 0
        %1038 = vmatprep.subr.mxu0 0.0
        %1039 = vmatpush1.msra.mxu0 0.0
        %1040 = vmatprep.subr.mxu0 0.0
        %1041 = vmatpush1.msra.mxu0 0.0
        %1042 = vmatprep.subr.mxu0 0.0
        %1043 = vmatpush1.msra.mxu0 0.0
        %1044 = vmatprep.subr.mxu0 0.0
        %1045 = vmatpush1.msra.mxu0 0.0
        %1046 = vmatprep.subr.mxu0 0.0
        %1047 = vmatpush1.msra.mxu0 0.0
        %1048 = vmatprep.subr.mxu0 0.0
        %1049 = vmatpush1.msra.mxu0 0.0
        %1050 = vmatprep.subr.mxu0 0.0
        %1051 = vmatpush1.msra.mxu0 0.0
        %1052 = vmatprep.subr.mxu0 0.0
        %1053 = vmatpush1.msra.mxu0 0.0
        %1054 = vmatprep.subr.mxu0 0.0
        %1055 = vmatpush1.msra.mxu0 0.0
        %1056 = vmatprep.subr.mxu0 0.0
        %1057 = vmatpush1.msra.mxu0 0.0
        %1058 = vmatprep.subr.mxu0 0.0
        %1059 = vmatpush1.msra.mxu0 0.0
        %1060 = vmatprep.subr.mxu0 0.0
        %1061 = vmatpush1.msra.mxu0 0.0
        %1062 = vmatprep.subr.mxu0 0.0
        %1063 = vmatpush1.msra.mxu0 0.0
        %1064 = vmatprep.subr.mxu0 0.0
        %1065 = vmatpush1.msra.mxu0 0.0
        %1066 = vmatprep.subr.mxu0 0.0
        %1067 = vmatpush1.msra.mxu0 %v1029
        %1068 = vmatprep.subr.mxu0 0.0
        %1069 = vmatpush1.msra.mxu0 %v1027
        %1070 = vmatprep.subr.mxu0 0.0
        %1071 = vmatpush2.msra.mxu0 0.0
        %1072 = vmatprep.subr.mxu0 0.0
        %1073 = vmatpush2.msra.mxu0 0.0
        %1074 = vmatprep.subr.mxu0 0.0
        %1075 = vmatpush2.msra.mxu0 0.0
        %1076 = vmatprep.subr.mxu0 0.0
        %1077 = vmatpush2.msra.mxu0 0.0
        %1078 = vmatprep.subr.mxu0 0.0
        %1079 = vmatpush2.msra.mxu0 0.0
        %1080 = vmatprep.subr.mxu0 0.0
        %1081 = vmatpush2.msra.mxu0 0.0
        %1082 = vmatprep.subr.mxu0 0.0
        %1083 = vmatpush2.msra.mxu0 0.0
        %1084 = vmatprep.subr.mxu0 0.0
        %1085 = vmatpush2.msra.mxu0 0.0
        %1086 = vmatprep.subr.mxu0 0.0
        %1087 = vmatpush2.msra.mxu0 0.0
        %1088 = vmatprep.subr.mxu0 0.0
        %1089 = vmatpush2.msra.mxu0 0.0
        %1090 = vmatprep.subr.mxu0 0.0
        %1091 = vmatpush2.msra.mxu0 0.0
        %1092 = vmatprep.subr.mxu0 0.0
        %1093 = vmatpush2.msra.mxu0 0.0
        %1094 = vmatprep.subr.mxu0 0.0
        %1095 = vmatpush2.msra.mxu0 0.0
        %1096 = vmatprep.subr.mxu0 0.0
        %1097 = vmatpush2.msra.mxu0 0.0
        %1098 = vmatprep.subr.mxu0 0.0
        %1099 = vmatpush2.msra.mxu0 0.0
        %1100 = vmatprep.subr.mxu0 0.0
        %1101 = vmatpush2.msra.mxu0 0.0
        %1102 = vmatprep.mubr.f32.mxu0 0.0
        %1103 = vmatmul.mubr.f32.gmra.mxu0 %v1033
        %v1104 = vpop.f32.mrf.mxu0
        %v1105 = vadd.f32 0.0, %v1104
        %v1106 = vpop.f32.mrf.mxu0
        %1107 = vmatprep.mubr.f32.mxu0 0.0
        %1108 = vmatmul.mubr.f32.gmra.mxu0 %v1036
        %v1109 = vpop.f32.mrf.mxu0
        %v1110 = vadd.f32 0.0, %v1109
        %v1111 = vpop.f32.mrf.mxu0
        %1112 = vdwg.mxu0
        %v1114 = vsel %vm712, %v1105, 0
        %v1117 = vsel %vm712, %v1110, 0
        %1119 = vmatprep.subr.mxu0 0.0
        %1120 = vmatpush1.msra.mxu0 0.0
        %1121 = vmatprep.subr.mxu0 0.0
        %1122 = vmatpush1.msra.mxu0 0.0
        %1123 = vmatprep.subr.mxu0 0.0
        %1124 = vmatpush1.msra.mxu0 0.0
        %1125 = vmatprep.subr.mxu0 0.0
        %1126 = vmatpush1.msra.mxu0 0.0
        %1127 = vmatprep.subr.mxu0 0.0
        %1128 = vmatpush1.msra.mxu0 0.0
        %1129 = vmatprep.subr.mxu0 0.0
        %1130 = vmatpush1.msra.mxu0 0.0
        %1131 = vmatprep.subr.mxu0 0.0
        %1132 = vmatpush1.msra.mxu0 0.0
        %1133 = vmatprep.subr.mxu0 0.0
        %1134 = vmatpush1.msra.mxu0 0.0
        %1135 = vmatprep.subr.mxu0 0.0
        %1136 = vmatpush1.msra.mxu0 0.0
        %1137 = vmatprep.subr.mxu0 0.0
        %1138 = vmatpush1.msra.mxu0 0.0
        %1139 = vmatprep.subr.mxu0 0.0
        %1140 = vmatpush1.msra.mxu0 0.0
        %1141 = vmatprep.subr.mxu0 0.0
        %1142 = vmatpush1.msra.mxu0 0.0
        %1143 = vmatprep.subr.mxu0 0.0
        %1144 = vmatpush1.msra.mxu0 0.0
        %1145 = vmatprep.subr.mxu0 0.0
        %1146 = vmatpush1.msra.mxu0 0.0
        %1147 = vmatprep.subr.mxu0 0.0
        %1148 = vmatpush1.msra.mxu0 %v705
        %1149 = vmatprep.subr.mxu0 0.0
        %1150 = vmatpush1.msra.mxu0 %v704
        %1151 = vmatprep.subr.mxu0 0.0
        %1152 = vmatpush2.msra.mxu0 0.0
        %1153 = vmatprep.subr.mxu0 0.0
        %1154 = vmatpush2.msra.mxu0 0.0
        %1155 = vmatprep.subr.mxu0 0.0
        %1156 = vmatpush2.msra.mxu0 0.0
        %1157 = vmatprep.subr.mxu0 0.0
        %1158 = vmatpush2.msra.mxu0 0.0
        %1159 = vmatprep.subr.mxu0 0.0
        %1160 = vmatpush2.msra.mxu0 0.0
        %1161 = vmatprep.subr.mxu0 0.0
        %1162 = vmatpush2.msra.mxu0 0.0
        %1163 = vmatprep.subr.mxu0 0.0
        %1164 = vmatpush2.msra.mxu0 0.0
        %1165 = vmatprep.subr.mxu0 0.0
        %1166 = vmatpush2.msra.mxu0 0.0
        %1167 = vmatprep.subr.mxu0 0.0
        %1168 = vmatpush2.msra.mxu0 0.0
        %1169 = vmatprep.subr.mxu0 0.0
        %1170 = vmatpush2.msra.mxu0 0.0
        %1171 = vmatprep.subr.mxu0 0.0
        %1172 = vmatpush2.msra.mxu0 0.0
        %1173 = vmatprep.subr.mxu0 0.0
        %1174 = vmatpush2.msra.mxu0 0.0
        %1175 = vmatprep.subr.mxu0 0.0
        %1176 = vmatpush2.msra.mxu0 0.0
        %1177 = vmatprep.subr.mxu0 0.0
        %1178 = vmatpush2.msra.mxu0 0.0
        %1179 = vmatprep.subr.mxu0 0.0
        %1180 = vmatpush2.msra.mxu0 0.0
        %1181 = vmatprep.subr.mxu0 0.0
        %1182 = vmatpush2.msra.mxu0 0.0
        %1183 = vmatprep.mubr.f32.mxu0 0.0
        %1184 = vmatmul.mubr.f32.gmra.mxu0 %v1114
        %v1185 = vpop.f32.mrf.mxu0
        %v1186 = vadd.f32 0.0, %v1185
        %v1187 = vpop.f32.mrf.mxu0
        %1188 = vmatprep.mubr.f32.mxu0 0.0
        %1189 = vmatmul.mubr.f32.gmra.mxu0 %v1117
        %v1190 = vpop.f32.mrf.mxu0
        %v1191 = vadd.f32 0.0, %v1190
        %v1192 = vpop.f32.mrf.mxu0
        %1193 = vdwg.mxu0
        %v1195 = vsel %vm712, %v901, 0
        %v1198 = vsel %vm712, %v906, 0
        %1200 = vmatprep.subr.mxu0 0.0
        %1201 = vmatpush1.msra.mxu0 0.0
        %1202 = vmatprep.subr.mxu0 0.0
        %1203 = vmatpush1.msra.mxu0 0.0
        %1204 = vmatprep.subr.mxu0 0.0
        %1205 = vmatpush1.msra.mxu0 0.0
        %1206 = vmatprep.subr.mxu0 0.0
        %1207 = vmatpush1.msra.mxu0 0.0
        %1208 = vmatprep.subr.mxu0 0.0
        %1209 = vmatpush1.msra.mxu0 0.0
        %1210 = vmatprep.subr.mxu0 0.0
        %1211 = vmatpush1.msra.mxu0 0.0
        %1212 = vmatprep.subr.mxu0 0.0
        %1213 = vmatpush1.msra.mxu0 0.0
        %1214 = vmatprep.subr.mxu0 0.0
        %1215 = vmatpush1.msra.mxu0 0.0
        %1216 = vmatprep.subr.mxu0 0.0
        %1217 = vmatpush1.msra.mxu0 0.0
        %1218 = vmatprep.subr.mxu0 0.0
        %1219 = vmatpush1.msra.mxu0 0.0
        %1220 = vmatprep.subr.mxu0 0.0
        %1221 = vmatpush1.msra.mxu0 0.0
        %1222 = vmatprep.subr.mxu0 0.0
        %1223 = vmatpush1.msra.mxu0 0.0
        %1224 = vmatprep.subr.mxu0 0.0
        %1225 = vmatpush1.msra.mxu0 0.0
        %1226 = vmatprep.subr.mxu0 0.0
        %1227 = vmatpush1.msra.mxu0 0.0
        %1228 = vmatprep.subr.mxu0 0.0
        %1229 = vmatpush1.msra.mxu0 %v703
        %1230 = vmatprep.subr.mxu0 0.0
        %1231 = vmatpush1.msra.mxu0 %v702
        %1232 = vmatprep.subr.mxu0 0.0
        %1233 = vmatpush2.msra.mxu0 0.0
        %1234 = vmatprep.subr.mxu0 0.0
        %1235 = vmatpush2.msra.mxu0 0.0
        %1236 = vmatprep.subr.mxu0 0.0
        %1237 = vmatpush2.msra.mxu0 0.0
        %1238 = vmatprep.subr.mxu0 0.0
        %1239 = vmatpush2.msra.mxu0 0.0
        %1240 = vmatprep.subr.mxu0 0.0
        %1241 = vmatpush2.msra.mxu0 0.0
        %1242 = vmatprep.subr.mxu0 0.0
        %1243 = vmatpush2.msra.mxu0 0.0
        %1244 = vmatprep.subr.mxu0 0.0
        %1245 = vmatpush2.msra.mxu0 0.0
        %1246 = vmatprep.subr.mxu0 0.0
        %1247 = vmatpush2.msra.mxu0 0.0
        %1248 = vmatprep.subr.mxu0 0.0
        %1249 = vmatpush2.msra.mxu0 0.0
        %1250 = vmatprep.subr.mxu0 0.0
        %1251 = vmatpush2.msra.mxu0 0.0
        %1252 = vmatprep.subr.mxu0 0.0
        %1253 = vmatpush2.msra.mxu0 0.0
        %1254 = vmatprep.subr.mxu0 0.0
        %1255 = vmatpush2.msra.mxu0 0.0
        %1256 = vmatprep.subr.mxu0 0.0
        %1257 = vmatpush2.msra.mxu0 0.0
        %1258 = vmatprep.subr.mxu0 0.0
        %1259 = vmatpush2.msra.mxu0 0.0
        %1260 = vmatprep.subr.mxu0 0.0
        %1261 = vmatpush2.msra.mxu0 0.0
        %1262 = vmatprep.subr.mxu0 0.0
        %1263 = vmatpush2.msra.mxu0 0.0
        %1264 = vmatprep.mubr.f32.mxu0 0.0
        %1265 = vmatmul.mubr.f32.gmra.mxu0 %v1195
        %v1266 = vpop.f32.mrf.mxu0
        %v1267 = vadd.f32 %v1186, %v1266
        %v1268 = vpop.f32.mrf.mxu0
        %1269 = vmatprep.mubr.f32.mxu0 0.0
        %1270 = vmatmul.mubr.f32.gmra.mxu0 %v1198
        %v1271 = vpop.f32.mrf.mxu0
        %v1272 = vadd.f32 %v1191, %v1271
        %v1273 = vpop.f32.mrf.mxu0
        %1274 = vdwg.mxu0
        %v1275 = vadd.f32 %v1267, %v610
        %v1276 = vadd.f32 %v1272, %v611
        %v1277 = vld [vmem:[%s585] sm:$0x1]
        %v1278 = vld [vmem:[%s588] sm:$0x1]
        %v1279 = vsel %vm620, %v1275, 0.0
        %1280 = vadd.xlane.f32.xlu0 %v1279
        %v1281 = vpop.xlane.xlu0 %1280
        %v1282 = vsel %vm620, %v1276, 0.0
        %1283 = vadd.xlane.f32.xlu0 %v1282
        %v1284 = vpop.xlane.xlu0 %1283
        %v1285 = vrcp.pop 32.0
        %v1286 = vmul.f32 %v1281, %v1285
        %v1287 = vmul.f32 %v1284, %v1285
        %v1288 = vsub.f32 %v1275, %v1286
        %v1289 = vsub.f32 %v1276, %v1287
        %v1290 = vmul.f32 %v1288, %v1288
        %v1291 = vmul.f32 %v1289, %v1289
        %v1292 = vsel %vm620, %v1290, 0.0
        %1293 = vadd.xlane.f32.xlu0 %v1292
        %v1294 = vpop.xlane.xlu0 %1293
        %v1295 = vsel %vm620, %v1291, 0.0
        %1296 = vadd.xlane.f32.xlu0 %v1295
        %v1297 = vpop.xlane.xlu0 %1296
        %v1298 = vmul.f32 %v1294, %v1285
        %v1299 = vmul.f32 %v1297, %v1285
        %v1300 = vadd.f32 %v1298, 1e-05
        %v1301 = vadd.f32 %v1299, 1e-05
        %v1302 = vrsqrt.pop %v1300
        %v1303 = vrsqrt.pop %v1301
        %v1304 = vmul.f32 %v1288, %v1302
        %v1305 = vmul.f32 %v1289, %v1303
        %v1307 = vlaneseq
        %v1308 = vshrl.u32 %v1307, 7
        %v1309 = vsub.s32 0, %v1308
        %v1310 = vrot.slane %v1277, %v1309
        %v1312 = vmul.f32 %v1304, %v1310
        %v1313 = vmul.f32 %v1305, %v1310
        %v1315 = vlaneseq
        %v1316 = vshrl.u32 %v1315, 7
        %v1317 = vsub.s32 0, %v1316
        %v1318 = vrot.slane %v1278, %v1317
        %v1320 = vadd.f32 %v1312, %v1318
        %v1321 = vadd.f32 %v1313, %v1318
        %v1322 = vld [vmem:[%s500] sm:$0xff]
        %v1323 = vld [vmem:[%s500 + $0x8] sm:$0xff]
        %v1324 = vld [vmem:[%s500 + $0x10] sm:$0xff]
        %v1325 = vld [vmem:[%s500 + $0x18] sm:$0xff]
        %v1326 = vld [vmem:[%s591] sm:$0x1]
        %v1328 = vlaneseq
        %v1329 = vshrl.u32 %v1328, 7
        %v1330 = vsub.s32 0, %v1329
        %v1331 = vrot.slane %v1326, %v1330
        %v1334 = vsel %vm620, %v1320, 0
        %v1337 = vsel %vm620, %v1321, 0
        %1339 = vmatprep.subr.mxu0 0.0
        %1340 = vmatpush1.msra.mxu0 0.0
        %1341 = vmatprep.subr.mxu0 0.0
        %1342 = vmatpush1.msra.mxu0 0.0
        %1343 = vmatprep.subr.mxu0 0.0
        %1344 = vmatpush1.msra.mxu0 0.0
        %1345 = vmatprep.subr.mxu0 0.0
        %1346 = vmatpush1.msra.mxu0 0.0
        %1347 = vmatprep.subr.mxu0 0.0
        %1348 = vmatpush1.msra.mxu0 0.0
        %1349 = vmatprep.subr.mxu0 0.0
        %1350 = vmatpush1.msra.mxu0 0.0
        %1351 = vmatprep.subr.mxu0 0.0
        %1352 = vmatpush1.msra.mxu0 0.0
        %1353 = vmatprep.subr.mxu0 0.0
        %1354 = vmatpush1.msra.mxu0 0.0
        %1355 = vmatprep.subr.mxu0 0.0
        %1356 = vmatpush1.msra.mxu0 0.0
        %1357 = vmatprep.subr.mxu0 0.0
        %1358 = vmatpush1.msra.mxu0 0.0
        %1359 = vmatprep.subr.mxu0 0.0
        %1360 = vmatpush1.msra.mxu0 0.0
        %1361 = vmatprep.subr.mxu0 0.0
        %1362 = vmatpush1.msra.mxu0 0.0
        %1363 = vmatprep.subr.mxu0 0.0
        %1364 = vmatpush1.msra.mxu0 %v1325
        %1365 = vmatprep.subr.mxu0 0.0
        %1366 = vmatpush1.msra.mxu0 %v1324
        %1367 = vmatprep.subr.mxu0 0.0
        %1368 = vmatpush1.msra.mxu0 %v1323
        %1369 = vmatprep.subr.mxu0 0.0
        %1370 = vmatpush1.msra.mxu0 %v1322
        %1371 = vmatprep.subr.mxu0 0.0
        %1372 = vmatpush2.msra.mxu0 0.0
        %1373 = vmatprep.subr.mxu0 0.0
        %1374 = vmatpush2.msra.mxu0 0.0
        %1375 = vmatprep.subr.mxu0 0.0
        %1376 = vmatpush2.msra.mxu0 0.0
        %1377 = vmatprep.subr.mxu0 0.0
        %1378 = vmatpush2.msra.mxu0 0.0
        %1379 = vmatprep.subr.mxu0 0.0
        %1380 = vmatpush2.msra.mxu0 0.0
        %1381 = vmatprep.subr.mxu0 0.0
        %1382 = vmatpush2.msra.mxu0 0.0
        %1383 = vmatprep.subr.mxu0 0.0
        %1384 = vmatpush2.msra.mxu0 0.0
        %1385 = vmatprep.subr.mxu0 0.0
        %1386 = vmatpush2.msra.mxu0 0.0
        %1387 = vmatprep.subr.mxu0 0.0
        %1388 = vmatpush2.msra.mxu0 0.0
        %1389 = vmatprep.subr.mxu0 0.0
        %1390 = vmatpush2.msra.mxu0 0.0
        %1391 = vmatprep.subr.mxu0 0.0
        %1392 = vmatpush2.msra.mxu0 0.0
        %1393 = vmatprep.subr.mxu0 0.0
        %1394 = vmatpush2.msra.mxu0 0.0
        %1395 = vmatprep.subr.mxu0 0.0
        %1396 = vmatpush2.msra.mxu0 0.0
        %1397 = vmatprep.subr.mxu0 0.0
        %1398 = vmatpush2.msra.mxu0 0.0
        %1399 = vmatprep.subr.mxu0 0.0
        %1400 = vmatpush2.msra.mxu0 0.0
        %1401 = vmatprep.subr.mxu0 0.0
        %1402 = vmatpush2.msra.mxu0 0.0
        %1403 = vmatprep.mubr.f32.mxu0 0.0
        %1404 = vmatmul.mubr.f32.gmra.mxu0 %v1334
        %v1405 = vpop.f32.mrf.mxu0
        %v1406 = vadd.f32 %v1331, %v1405
        %v1407 = vpop.f32.mrf.mxu0
        %1408 = vmatprep.mubr.f32.mxu0 0.0
        %1409 = vmatmul.mubr.f32.gmra.mxu0 %v1337
        %v1410 = vpop.f32.mrf.mxu0
        %v1411 = vadd.f32 %v1331, %v1410
        %v1412 = vpop.f32.mrf.mxu0
        %1413 = vdwg.mxu0
        %v1414 = vmax.f32 %v1406, 0.0
        %v1415 = vmax.f32 %v1411, 0.0
        %v1416 = vld [vmem:[%s509] sm:$0xff]
        %v1417 = vld [vmem:[%s509 + $0x8] sm:$0xff]
        %v1418 = vld [vmem:[%s509 + $0x10] sm:$0xff]
        %v1419 = vld [vmem:[%s509 + $0x18] sm:$0xff]
        %v1420 = vld [vmem:[%s594] sm:$0x1]
        %v1422 = vlaneseq
        %v1423 = vshrl.u32 %v1422, 7
        %v1424 = vsub.s32 0, %v1423
        %v1425 = vrot.slane %v1420, %v1424
        %v1428 = vsel %vm620, %v1414, 0
        %v1431 = vsel %vm620, %v1415, 0
        %1433 = vmatprep.subr.mxu0 0.0
        %1434 = vmatpush1.msra.mxu0 0.0
        %1435 = vmatprep.subr.mxu0 0.0
        %1436 = vmatpush1.msra.mxu0 0.0
        %1437 = vmatprep.subr.mxu0 0.0
        %1438 = vmatpush1.msra.mxu0 0.0
        %1439 = vmatprep.subr.mxu0 0.0
        %1440 = vmatpush1.msra.mxu0 0.0
        %1441 = vmatprep.subr.mxu0 0.0
        %1442 = vmatpush1.msra.mxu0 0.0
        %1443 = vmatprep.subr.mxu0 0.0
        %1444 = vmatpush1.msra.mxu0 0.0
        %1445 = vmatprep.subr.mxu0 0.0
        %1446 = vmatpush1.msra.mxu0 0.0
        %1447 = vmatprep.subr.mxu0 0.0
        %1448 = vmatpush1.msra.mxu0 0.0
        %1449 = vmatprep.subr.mxu0 0.0
        %1450 = vmatpush1.msra.mxu0 0.0
        %1451 = vmatprep.subr.mxu0 0.0
        %1452 = vmatpush1.msra.mxu0 0.0
        %1453 = vmatprep.subr.mxu0 0.0
        %1454 = vmatpush1.msra.mxu0 0.0
        %1455 = vmatprep.subr.mxu0 0.0
        %1456 = vmatpush1.msra.mxu0 0.0
        %1457 = vmatprep.subr.mxu0 0.0
        %1458 = vmatpush1.msra.mxu0 %v1419
        %1459 = vmatprep.subr.mxu0 0.0
        %1460 = vmatpush1.msra.mxu0 %v1418
        %1461 = vmatprep.subr.mxu0 0.0
        %1462 = vmatpush1.msra.mxu0 %v1417
        %1463 = vmatprep.subr.mxu0 0.0
        %1464 = vmatpush1.msra.mxu0 %v1416
        %1465 = vmatprep.subr.mxu0 0.0
        %1466 = vmatpush2.msra.mxu0 0.0
        %1467 = vmatprep.subr.mxu0 0.0
        %1468 = vmatpush2.msra.mxu0 0.0
        %1469 = vmatprep.subr.mxu0 0.0
        %1470 = vmatpush2.msra.mxu0 0.0
        %1471 = vmatprep.subr.mxu0 0.0
        %1472 = vmatpush2.msra.mxu0 0.0
        %1473 = vmatprep.subr.mxu0 0.0
        %1474 = vmatpush2.msra.mxu0 0.0
        %1475 = vmatprep.subr.mxu0 0.0
        %1476 = vmatpush2.msra.mxu0 0.0
        %1477 = vmatprep.subr.mxu0 0.0
        %1478 = vmatpush2.msra.mxu0 0.0
        %1479 = vmatprep.subr.mxu0 0.0
        %1480 = vmatpush2.msra.mxu0 0.0
        %1481 = vmatprep.subr.mxu0 0.0
        %1482 = vmatpush2.msra.mxu0 0.0
        %1483 = vmatprep.subr.mxu0 0.0
        %1484 = vmatpush2.msra.mxu0 0.0
        %1485 = vmatprep.subr.mxu0 0.0
        %1486 = vmatpush2.msra.mxu0 0.0
        %1487 = vmatprep.subr.mxu0 0.0
        %1488 = vmatpush2.msra.mxu0 0.0
        %1489 = vmatprep.subr.mxu0 0.0
        %1490 = vmatpush2.msra.mxu0 0.0
        %1491 = vmatprep.subr.mxu0 0.0
        %1492 = vmatpush2.msra.mxu0 0.0
        %1493 = vmatprep.subr.mxu0 0.0
        %1494 = vmatpush2.msra.mxu0 0.0
        %1495 = vmatprep.subr.mxu0 0.0
        %1496 = vmatpush2.msra.mxu0 0.0
        %1497 = vmatprep.mubr.f32.mxu0 0.0
        %1498 = vmatmul.mubr.f32.gmra.mxu0 %v1428
        %v1499 = vpop.f32.mrf.mxu0
        %v1500 = vadd.f32 %v1425, %v1499
        %v1501 = vpop.f32.mrf.mxu0
        %1502 = vmatprep.mubr.f32.mxu0 0.0
        %1503 = vmatmul.mubr.f32.gmra.mxu0 %v1431
        %v1504 = vpop.f32.mrf.mxu0
        %v1505 = vadd.f32 %v1425, %v1504
        %v1506 = vpop.f32.mrf.mxu0
        %1507 = vdwg.mxu0
        %v1508 = vadd.f32 %v1500, %v1320
        %v1509 = vadd.f32 %v1505, %v1321
        %v1510 = vld [vmem:[%s597] sm:$0x1]
        %v1511 = vld [vmem:[%s600] sm:$0x1]
        %v1512 = vsel %vm620, %v1508, 0.0
        %1513 = vadd.xlane.f32.xlu0 %v1512
        %v1514 = vpop.xlane.xlu0 %1513
        %v1515 = vsel %vm620, %v1509, 0.0
        %1516 = vadd.xlane.f32.xlu0 %v1515
        %v1517 = vpop.xlane.xlu0 %1516
        %v1518 = vmul.f32 %v1514, %v1285
        %v1519 = vmul.f32 %v1517, %v1285
        %v1520 = vsub.f32 %v1508, %v1518
        %v1521 = vsub.f32 %v1509, %v1519
        %v1522 = vmul.f32 %v1520, %v1520
        %v1523 = vmul.f32 %v1521, %v1521
        %v1524 = vsel %vm620, %v1522, 0.0
        %1525 = vadd.xlane.f32.xlu0 %v1524
        %v1526 = vpop.xlane.xlu0 %1525
        %v1527 = vsel %vm620, %v1523, 0.0
        %1528 = vadd.xlane.f32.xlu0 %v1527
        %v1529 = vpop.xlane.xlu0 %1528
        %v1530 = vmul.f32 %v1526, %v1285
        %v1531 = vmul.f32 %v1529, %v1285
        %v1532 = vadd.f32 %v1530, 1e-05
        %v1533 = vadd.f32 %v1531, 1e-05
        %v1534 = vrsqrt.pop %v1532
        %v1535 = vrsqrt.pop %v1533
        %v1536 = vmul.f32 %v1520, %v1534
        %v1537 = vmul.f32 %v1521, %v1535
        %v1539 = vlaneseq
        %v1540 = vshrl.u32 %v1539, 7
        %v1541 = vsub.s32 0, %v1540
        %v1542 = vrot.slane %v1510, %v1541
        %v1544 = vmul.f32 %v1536, %v1542
        %v1545 = vmul.f32 %v1537, %v1542
        %v1547 = vlaneseq
        %v1548 = vshrl.u32 %v1547, 7
        %v1549 = vsub.s32 0, %v1548
        %v1550 = vrot.slane %v1511, %v1549
        %v1552 = vadd.f32 %v1544, %v1550
        %v1553 = vadd.f32 %v1545, %v1550
        %1554 = vst.msk [vmem:[#allocation2] sm:$0xff] %vm620, %v1552
        %1555 = vst.msk [vmem:[#allocation2 + $0x8] sm:$0xff] %vm620, %v1553
        %p1556 = scmp.eq.s32.totalorder %s30, 5
        // Predicated region
        $region85: #{encoder_forward.1} parent=67 // pred_check
          %p1557 = pneg %p1556
        $region86: #{encoder_forward.1} parent=67 // pred_check_branch
          %1559 = sbr.rel (%p1557) target = $region88
        $region87: #{encoder_forward.1} parent=67 // pred_region
          %1560 = vst.msk [vmem:[#allocation9] sm:$0xff] %vm620, %v1552
          %1561 = vst.msk [vmem:[#allocation9 + $0x8] sm:$0xff] %vm620, %v1553
        $region88: #{encoder_forward.1} parent=67 // pred_fallthru
          _
        // Predicated region
        $region89: #{encoder_forward.1} parent=67 // pred_check
          %p1562 = pneg %p345
        $region90: #{encoder_forward.1} parent=67 // pred_check_branch
          %1564 = sbr.rel (%p1562) target = $region92
        $region91: #{encoder_forward.1} parent=67 // pred_region
          %s1566 = ssub.s32 256, 256
          %1567 = vsyncadd [#allocation5], %s1566
          %s1568 = sshll.u32 [#allocation9], 4
          %s1569 = int_to_ptr.vmem [resolvable:$true] %s1568
          %1574 = dma.vmem_to_hbm [thread:$0]  %s1569, 256, %s12, [#allocation5], 128, 128, 8
        $region92: #{encoder_forward.1} parent=67 // pred_fallthru
          _
        // Predicated region
        $region93: #{encoder_forward.1} parent=67 // pred_check
          %p1575 = pneg %p345
        $region94: #{encoder_forward.1} parent=67 // pred_check_branch
          %1577 = sbr.rel (%p1575) target = $region96
        $region95: #{encoder_forward.1} parent=67 // pred_region
          %1578 = dma.done [#allocation5], 256
        $region96: #{encoder_forward.1} parent=67 // pred_fallthru
          _
      $region68: #{encoder_forward.1} parent=5 // pred_fallthru
        _
      %p1579 = scmp.le.s32.totalorder 2, %s25
      // Predicated region
      $region97: #{encoder_forward.1} parent=5 // pred_check
        %p1580 = pneg %p1579
      $region98: #{encoder_forward.1} parent=5 // pred_check_branch
        %1582 = sbr.rel (%p1580) target = $region100
      $region99: #{encoder_forward.1} parent=5 // pred_region
        %s1583 = ssub.s32 %s25, 2
      $region100: #{encoder_forward.1} parent=5 // pred_fallthru
        _
    $region6: #{encoder_forward.1} parent=1 // loop_footer
      %s29 = sadd.s32 1, %s25
    $region7: #{encoder_forward.1} parent=1 // loop_footer_branch
      %24 = sbr.rel target = $region3
    $region8: #{encoder_forward.1} parent=1 // loop_exit
      _
    %1584 = vsyncpa [#allocation4], 1
    %s1585 = scalar_lea.sflag [#allocation4], 1
    %1586 = vsyncpa %s1585, 1
    %1587 = vsyncpa [#allocation7], 1
    %s1588 = scalar_lea.sflag [#allocation7], 1
    %1589 = vsyncpa %s1588, 1
    %1590 = vsyncpa [#allocation5], 1
    %s1591 = scalar_lea.sflag [#allocation5], 1
    %1592 = vsyncpa %s1591, 1

</llo_original>
